<compile_context>
chip_gen: v7x
topology: tpu7x:2x2x1
jax: 0.10.0
libtpu: 0.0.40
codegen_flags: <defaults>
</compile_context>

<pallas_src>
import math
import functools

import jax
import jax.numpy as jnp
from jax import lax
from jax.experimental import pallas as pl
from jax.experimental.pallas import tpu as pltpu

D_MODEL = 1024   # bart-large d_model (ValueHead hardcodes 1024 -> 512 -> 1)
H1 = 512         # ValueHead hidden
B_SUBLANE = 8    # pad batch rows to a sublane multiple for (8,128)-clean stores


# ---------------------------------------------------------------------------
# LM head kernel: logits[:, j*tv:(j+1)*tv] = feat @ W_lm[:, tile] + bias[tile]
# bf16 operands streamed from HBM, f32 MXU accumulation. Vocab axis parallel.
# ---------------------------------------------------------------------------
def lm_head_kernel(feat_ref, wlm_ref, blm_ref, logits_ref):
    logits_ref[...] = (
        jnp.dot(feat_ref[...], wlm_ref[...],
                preferred_element_type=jnp.float32)
        + blm_ref[...]
    ).astype(logits_ref.dtype)


def _pad_to(x, axis, target):
    pad = target - x.shape[axis]
    if pad == 0:
        return x
    widths = [(0, 0)] * x.ndim
    widths[axis] = (0, pad)
    return jnp.pad(x, widths)


# ---------------------------------------------------------------------------
# One-time weight preparation (model init).  Runs ONCE, never per forward.
# ---------------------------------------------------------------------------
def prepare_lm_head(w_lm_f32, b_lm_f32):
    """Pad vocab to a lane (128) multiple and cast the big weight to bf16."""
    V = w_lm_f32.shape[1]
    V128 = pl.cdiv(V, 128) * 128
    w = _pad_to(w_lm_f32, 1, V128).astype(jnp.bfloat16)   # streamed in bf16
    b = _pad_to(b_lm_f32, 1, V128).astype(jnp.float32)    # bias stays f32
    return w, b


def pick_lm_head_config(vocab_padded, d_model=D_MODEL, b_pad=B_SUBLANE):
    """Generation-dependent tile / semantics / VMEM-limit choice (init-time)."""
    try:
        kind = jax.devices()[0].device_kind.lower()
    except Exception:  # pragma: no cover - defensive, keep defaults
        kind = ""
    if "v5" in kind:                      # v5e: 16 MiB scoped default -> stay small
        tile_v, core_parallel = 2048, False
    elif "v6" in kind:                    # v6e: step overhead ~12% -> modest bump
        tile_v, core_parallel = 3072, False
    elif "v7" in kind or "7x" in kind:    # v7x: step overhead ~25-30% -> big tiles
        tile_v, core_parallel = 4096, True
    else:
        tile_v, core_parallel = 2048, False
    tile_v = min(tile_v, vocab_padded)

    if core_parallel:
        # balance the two TensorCores: shrink tile until the tile count is even
        while pl.cdiv(vocab_padded, tile_v) % 2 == 1 and tile_v > 128:
            tile_v -= 128

    if core_parallel and hasattr(pltpu, "CORE_PARALLEL"):
        dim_sem = pltpu.CORE_PARALLEL     # actually shards grid across 2 TCs
    else:
        dim_sem = "parallel"

    # double-buffered weight tile + output tile + feat + bias + headroom
    vmem_limit = (2 * d_model * tile_v * 2      # bf16 W_lm tile x2 buffers
                  + 2 * b_pad * tile_v * 4      # f32 logits tile x2 buffers
                  + 2 * b_pad * d_model * 2     # bf16 feat
                  + 2 * tile_v * 4              # f32 bias tile
                  + (4 << 20))                  # headroom
    return dict(tile_v=int(tile_v), dim_semantics=dim_sem,
                vmem_limit_bytes=int(vmem_limit))


# ---------------------------------------------------------------------------
# Forward heads.  w_lm_bf16 / b_lm_pad come from prepare_lm_head() (init-time).
# ---------------------------------------------------------------------------
def bart_policy_heads(hidden, seqlen, w_lm_bf16, b_lm_pad, w1, b1, w2, b2, *,
                      vocab_size, tile_v, dim_semantics, vmem_limit_bytes):
    """hidden: (B, T, D) f32 decoder last hidden states; seqlen: (B,) int32.

    Returns (action_logits (B, V) f32, values (B,) f32)."""
    B, T, D = hidden.shape
    V128 = w_lm_bf16.shape[1]

    # 1) gather last valid decoder position per row (torch .gather trick);
    #    clamp guards seqlen==0 (torch would silently wrap with -1).
    idx = jnp.clip(seqlen - 1, 0, T - 1)
    feat = jnp.take_along_axis(hidden, idx[:, None, None], axis=1)[:, 0, :]

    # pad batch to a sublane multiple so (B_pad, tile_v) stores are (8,128)-clean
    B_pad = max(B_SUBLANE, pl.cdiv(B, B_SUBLANE) * B_SUBLANE)
    feat_p = _pad_to(feat, 0, B_pad)
    feat_bf16 = feat_p.astype(jnp.bfloat16)

    tv = min(tile_v, V128)
    nv = pl.cdiv(V128, tv)          # ragged last block: Pallas masks OOB stores

    logits_pad = pl.pallas_call(
        lm_head_kernel,
        out_shape=jax.ShapeDtypeStruct((B_pad, V128), jnp.float32),
        grid=(nv,),
        in_specs=[
            # constant block index across j -> Pallas elides re-DMA of feat
            pl.BlockSpec((B_pad, D), lambda j: (0, 0)),     # feat (bf16, tiny)
            pl.BlockSpec((D, tv), lambda j: (0, j)),        # W_lm tile (bf16)
            pl.BlockSpec((1, tv), lambda j: (0, j)),        # final_logits_bias tile
        ],
        out_specs=pl.BlockSpec((B_pad, tv), lambda j: (0, j)),
        compiler_params=pltpu.CompilerParams(
            dimension_semantics=(dim_semantics,),
            vmem_limit_bytes=vmem_limit_bytes),
    )(feat_bf16, w_lm_bf16, b_lm_pad)

    # 3) ValueHead: per perf review, plain XLA (tiny 8x1024x512 matmul);
    #    HIGHEST precision keeps torch-f32 numerics at negligible cost.
    h = jnp.dot(feat, w1, precision=lax.Precision.HIGHEST) + b1[0]
    h = 0.5 * h * (1.0 + lax.erf(h * (1.0 / math.sqrt(2.0))))   # exact (erf) gelu
    values = jnp.sum(h * w2[0], axis=-1) + b2[0, 0]              # Linear(512,1)

    # padded batch rows / padded+ragged vocab columns never reach the caller
    return logits_pad[:B, :vocab_size], values


# ---------------------------------------------------------------------------
# References for verification
# ---------------------------------------------------------------------------
def reference_f32(hidden, seqlen, w_lm, b_lm, w1, b1, w2, b2):
    """Original torch-f32 semantics."""
    B, T, _ = hidden.shape
    idx = jnp.clip(seqlen - 1, 0, T - 1)
    feat = hidden[jnp.arange(B), idx]                                 # (B, D)
    logits = jnp.dot(feat, w_lm, precision=lax.Precision.HIGHEST) + b_lm[0]
    h = jnp.dot(feat, w1, precision=lax.Precision.HIGHEST) + b1[0]
    h = 0.5 * h * (1.0 + jax.scipy.special.erf(h / math.sqrt(2.0)))
    values = jnp.sum(h * w2[0], axis=-1) + b2[0, 0]
    return logits, values


def reference_bf16_logits(hidden, seqlen, w_lm, b_lm):
    """Matches the kernel's bf16-operand / f32-accumulate LM-head numerics."""
    B, T, _ = hidden.shape
    idx = jnp.clip(seqlen - 1, 0, T - 1)
    feat = hidden[jnp.arange(B), idx]
    return jnp.dot(feat.astype(jnp.bfloat16), w_lm.astype(jnp.bfloat16),
                   preferred_element_type=jnp.float32) + b_lm[0]


if __name__ == "__main__":
    B, T = 4, 8
    V = 1000             # synthetic small vocab (real bart-large ~50k; same tiling)
    key = jax.random.PRNGKey(0)
    k = jax.random.split(key, 8)

    hidden = jax.random.normal(k[0], (B, T, D_MODEL), dtype=jnp.float32)
    seqlen = jax.random.randint(k[1], (B,), 1, T + 1, dtype=jnp.int32)

    # deterministic synthetic parameters (shapes from the module's __init__)
    w_lm = jax.random.normal(k[2], (D_MODEL, V), dtype=jnp.float32) * 0.02
    b_lm = jnp.zeros((1, V), dtype=jnp.float32)                             # final_logits_bias
    w1 = jax.random.normal(k[3], (D_MODEL, H1), dtype=jnp.float32) * 0.02   # linear1.weight.T
    b1 = jax.random.normal(k[4], (1, H1), dtype=jnp.float32) * 0.02         # linear1.bias
    w2 = jax.random.normal(k[5], (1, H1), dtype=jnp.float32) * 0.02         # linear2.weight
    b2 = jax.random.normal(k[6], (1, 1), dtype=jnp.float32) * 0.02          # linear2.bias

    # ---- one-time init path (NOT per forward): pad + bf16-cast the LM weight
    w_lm_bf16, b_lm_pad = prepare_lm_head(w_lm, b_lm)
    w_lm_bf16, b_lm_pad = jax.block_until_ready((w_lm_bf16, b_lm_pad))
    cfg = pick_lm_head_config(w_lm_bf16.shape[1])

    fn = jax.jit(functools.partial(bart_policy_heads, vocab_size=V, **cfg))
    logits, values = jax.block_until_ready(
        fn(hidden, seqlen, w_lm_bf16, b_lm_pad, w1, b1, w2, b2))

    # tight check against a reference with matching (bf16-stream) numerics
    ref_logits_bf16 = reference_bf16_logits(hidden, seqlen, w_lm, b_lm)
    # loose check against the original torch-f32 path (perf-review concern)
    ref_logits_f32, ref_values = reference_f32(
        hidden, seqlen, w_lm, b_lm, w1, b1, w2, b2)

    assert logits.shape == (B, V) and values.shape == (B,)
    assert jnp.allclose(logits, ref_logits_bf16, atol=2e-3, rtol=2e-3)
    assert jnp.allclose(logits, ref_logits_f32, atol=3e-2, rtol=3e-2)
    assert jnp.allclose(values, ref_values, atol=1e-3, rtol=1e-3)
    print("KERNEL_OK")
</pallas_src>

<mosaic_0001>
module attributes {stable_mosaic.version = 11 : i64} {
  func.func @lm_head_kernel(%arg0: i32, %arg1: memref<8x1024xbf16, #tpu.memory_space<vmem>>, %arg2: memref<1024x1024xbf16, #tpu.memory_space<vmem>>, %arg3: memref<1x1024xf32, #tpu.memory_space<vmem>>, %arg4: memref<8x1024xf32, #tpu.memory_space<vmem>>) attributes {dimension_semantics = [#tpu.dimension_semantics<parallel>], iteration_bounds = array<i64: 1>, scalar_prefetch = 0 : i64, scratch_operands = 0 : i64, tpu.core_type = #tpu.core_type<tc>, window_params = [{pipeline_mode = #tpu.pipeline_mode<synchronous>, transform_indices = @transform_0, window_bounds = array<i64: 8, 1024>}, {transform_indices = @transform_1, window_bounds = array<i64: 1024, 1024>}, {transform_indices = @transform_2, window_bounds = array<i64: 1, 1024>}, {transform_indices = @transform_3, window_bounds = array<i64: 8, 1024>}]} {
    %c0 = arith.constant 0 : index
    %c0_0 = arith.constant 0 : index
    %0 = vector.load %arg1[%c0, %c0_0] : memref<8x1024xbf16, #tpu.memory_space<vmem>>, vector<8x1024xbf16>
    %c0_1 = arith.constant 0 : index
    %c0_2 = arith.constant 0 : index
    %1 = vector.load %arg2[%c0_1, %c0_2] : memref<1024x1024xbf16, #tpu.memory_space<vmem>>, vector<1024x1024xbf16>
    %cst = arith.constant dense<0.000000e+00> : vector<8x1024xf32>
    %2 = tpu.matmul %0, %1, %cst {dimension_numbers = #tpu.dot_dimension_numbers<[1], [0], [0], [1], [0, 0, 1, 1], [], []>} : vector<8x1024xbf16>, vector<1024x1024xbf16>, vector<8x1024xf32> -> vector<8x1024xf32>
    %c0_3 = arith.constant 0 : index
    %c0_4 = arith.constant 0 : index
    %3 = vector.load %arg3[%c0_3, %c0_4] : memref<1x1024xf32, #tpu.memory_space<vmem>>, vector<1x1024xf32>
    %4 = vector.broadcast %3 : vector<1x1024xf32> to vector<8x1024xf32>
    %5 = arith.addf %2, %4 : vector<8x1024xf32>
    %c0_5 = arith.constant 0 : index
    %c0_6 = arith.constant 0 : index
    %6 = vector.load %arg4[%c0_5, %c0_6] : memref<8x1024xf32, #tpu.memory_space<vmem>>, vector<8x1024xf32>
    tpu.vector_store %arg4[%c0_5, %c0_6], %5 {strides = array<i32>} : memref<8x1024xf32, #tpu.memory_space<vmem>>, vector<8x1024xf32>,
    return
  }
  func.func @transform_0(%arg0: i32) -> (i32, i32) {
    %c0_i32 = arith.constant 0 : i32
    %c0_i32_0 = arith.constant 0 : i32
    %c0_i32_1 = arith.constant 0 : i32
    return %c0_i32, %c0_i32_0 : i32, i32
  }
  func.func @transform_1(%arg0: i32) -> (i32, i32) {
    %c0_i32 = arith.constant 0 : i32
    %c0_i32_0 = arith.constant 0 : i32
    return %c0_i32, %arg0 : i32, i32
  }
  func.func @transform_2(%arg0: i32) -> (i32, i32) {
    %c0_i32 = arith.constant 0 : i32
    %c0_i32_0 = arith.constant 0 : i32
    return %c0_i32, %arg0 : i32, i32
  }
  func.func @transform_3(%arg0: i32) -> (i32, i32) {
    %c0_i32 = arith.constant 0 : i32
    %c0_i32_0 = arith.constant 0 : i32
    return %c0_i32, %arg0 : i32, i32
  }
}

</mosaic_0001>

<llo_original>
// kernel: bart_policy_heads.1
$region0: #{bart_policy_heads.1}
  #allocation0 [shape = 'u32[]', space=smem, size = 0x4, offset = 0x4, fixed_abs, tag = 'smem constant byte address 0x4 - core index']
  #allocation1 [shape = 'u32[144,128]{1,0:T(1,128)}', space=vmem, size = 0x12000, scoped, tag = 'internal scratch']
  %s0 = inlined_call_operand.vmem [shape: bf16[8,1024], index: 0, kind: input, shape index: {}]
  %s1 = inlined_call_operand.vmem [shape: bf16[1024,1024], index: 1, kind: input, shape index: {}]
  %s2 = inlined_call_operand.vmem [shape: f32[1,1024], index: 2, kind: input, shape index: {}]
  %s3 = inlined_call_operand.vmem [shape: f32[8,1024], index: 3, kind: output, shape index: {}]
  %s4 = sld [smem:[#allocation0]]
  $region22: #{bart_policy_heads.1} parent=0
    _
  %s6 = ssub.s32 1, %s4
  %s7 = scalar_select 0, %s6, %s4
  // Predicated region
  $region2: #{bart_policy_heads.1} parent=0 // pred_check
    _
  $region3: #{bart_policy_heads.1} parent=0 // pred_check_branch
    %9 = sbr.rel (0) target = $region5
  $region4: #{bart_policy_heads.1} parent=0 // pred_region
    _
  $region5: #{bart_policy_heads.1} parent=0 // pred_fallthru
    _
  // Predicated region
  $region6: #{bart_policy_heads.1} parent=0 // pred_check
    _
  $region7: #{bart_policy_heads.1} parent=0 // pred_check_branch
    %11 = sbr.rel (0) target = $region9
  $region8: #{bart_policy_heads.1} parent=0 // pred_region
    _
  $region9: #{bart_policy_heads.1} parent=0 // pred_fallthru
    _
  // Predicated region
  $region10: #{bart_policy_heads.1} parent=0 // pred_check
    _
  $region11: #{bart_policy_heads.1} parent=0 // pred_check_branch
    %13 = sbr.rel (0) target = $region13
  $region12: #{bart_policy_heads.1} parent=0 // pred_region
    _
  $region13: #{bart_policy_heads.1} parent=0 // pred_fallthru
    _
  %v14 = vld [vmem:[%s0] sm:$0xff]
  %v15 = vld [vmem:[%s0 + $0x8] sm:$0xff]
  %v16 = vld [vmem:[%s0 + $0x10] sm:$0xff]
  %v17 = vld [vmem:[%s0 + $0x18] sm:$0xff]
  %v18 = vld [vmem:[%s1] sm:$0xff]
  %v19 = vld [vmem:[%s1 + $0x8] sm:$0xff]
  %v20 = vld [vmem:[%s1 + $0x10] sm:$0xff]
  %v21 = vld [vmem:[%s1 + $0x18] sm:$0xff]
  %v22 = vld [vmem:[%s1 + $0x20] sm:$0xff]
  %v23 = vld [vmem:[%s1 + $0x28] sm:$0xff]
  %v24 = vld [vmem:[%s1 + $0x30] sm:$0xff]
  %v25 = vld [vmem:[%s1 + $0x38] sm:$0xff]
  %v26 = vld [vmem:[%s1 + $0x40] sm:$0xff]
  %v27 = vld [vmem:[%s1 + $0x48] sm:$0xff]
  %v28 = vld [vmem:[%s1 + $0x50] sm:$0xff]
  %v29 = vld [vmem:[%s1 + $0x58] sm:$0xff]
  %v30 = vld [vmem:[%s1 + $0x60] sm:$0xff]
  %v31 = vld [vmem:[%s1 + $0x68] sm:$0xff]
  %v32 = vld [vmem:[%s1 + $0x70] sm:$0xff]
  %v33 = vld [vmem:[%s1 + $0x78] sm:$0xff]
  %v34 = vld [vmem:[%s1 + $0x80] sm:$0xff]
  %v35 = vld [vmem:[%s1 + $0x88] sm:$0xff]
  %v36 = vld [vmem:[%s1 + $0x90] sm:$0xff]
  %v37 = vld [vmem:[%s1 + $0x98] sm:$0xff]
  %v38 = vld [vmem:[%s1 + $0xa0] sm:$0xff]
  %v39 = vld [vmem:[%s1 + $0xa8] sm:$0xff]
  %v40 = vld [vmem:[%s1 + $0xb0] sm:$0xff]
  %v41 = vld [vmem:[%s1 + $0xb8] sm:$0xff]
  %v42 = vld [vmem:[%s1 + $0xc0] sm:$0xff]
  %v43 = vld [vmem:[%s1 + $0xc8] sm:$0xff]
  %v44 = vld [vmem:[%s1 + $0xd0] sm:$0xff]
  %v45 = vld [vmem:[%s1 + $0xd8] sm:$0xff]
  %v46 = vld [vmem:[%s1 + $0xe0] sm:$0xff]
  %v47 = vld [vmem:[%s1 + $0xe8] sm:$0xff]
  %v48 = vld [vmem:[%s1 + $0xf0] sm:$0xff]
  %v49 = vld [vmem:[%s1 + $0xf8] sm:$0xff]
  %v50 = vld [vmem:[%s1 + $0x100] sm:$0xff]
  %v51 = vld [vmem:[%s1 + $0x108] sm:$0xff]
  %v52 = vld [vmem:[%s1 + $0x110] sm:$0xff]
  %v53 = vld [vmem:[%s1 + $0x118] sm:$0xff]
  %v54 = vld [vmem:[%s1 + $0x120] sm:$0xff]
  %v55 = vld [vmem:[%s1 + $0x128] sm:$0xff]
  %v56 = vld [vmem:[%s1 + $0x130] sm:$0xff]
  %v57 = vld [vmem:[%s1 + $0x138] sm:$0xff]
  %v58 = vld [vmem:[%s1 + $0x140] sm:$0xff]
  %v59 = vld [vmem:[%s1 + $0x148] sm:$0xff]
  %v60 = vld [vmem:[%s1 + $0x150] sm:$0xff]
  %v61 = vld [vmem:[%s1 + $0x158] sm:$0xff]
  %v62 = vld [vmem:[%s1 + $0x160] sm:$0xff]
  %v63 = vld [vmem:[%s1 + $0x168] sm:$0xff]
  %v64 = vld [vmem:[%s1 + $0x170] sm:$0xff]
  %v65 = vld [vmem:[%s1 + $0x178] sm:$0xff]
  %v66 = vld [vmem:[%s1 + $0x180] sm:$0xff]
  %v67 = vld [vmem:[%s1 + $0x188] sm:$0xff]
  %v68 = vld [vmem:[%s1 + $0x190] sm:$0xff]
  %v69 = vld [vmem:[%s1 + $0x198] sm:$0xff]
  %v70 = vld [vmem:[%s1 + $0x1a0] sm:$0xff]
  %v71 = vld [vmem:[%s1 + $0x1a8] sm:$0xff]
  %v72 = vld [vmem:[%s1 + $0x1b0] sm:$0xff]
  %v73 = vld [vmem:[%s1 + $0x1b8] sm:$0xff]
  %v74 = vld [vmem:[%s1 + $0x1c0] sm:$0xff]
  %v75 = vld [vmem:[%s1 + $0x1c8] sm:$0xff]
  %v76 = vld [vmem:[%s1 + $0x1d0] sm:$0xff]
  %v77 = vld [vmem:[%s1 + $0x1d8] sm:$0xff]
  %v78 = vld [vmem:[%s1 + $0x1e0] sm:$0xff]
  %v79 = vld [vmem:[%s1 + $0x1e8] sm:$0xff]
  %v80 = vld [vmem:[%s1 + $0x1f0] sm:$0xff]
  %v81 = vld [vmem:[%s1 + $0x1f8] sm:$0xff]
  %v82 = vld [vmem:[%s1 + $0x200] sm:$0xff]
  %v83 = vld [vmem:[%s1 + $0x208] sm:$0xff]
  %v84 = vld [vmem:[%s1 + $0x210] sm:$0xff]
  %v85 = vld [vmem:[%s1 + $0x218] sm:$0xff]
  %v86 = vld [vmem:[%s1 + $0x220] sm:$0xff]
  %v87 = vld [vmem:[%s1 + $0x228] sm:$0xff]
  %v88 = vld [vmem:[%s1 + $0x230] sm:$0xff]
  %v89 = vld [vmem:[%s1 + $0x238] sm:$0xff]
  %v90 = vld [vmem:[%s1 + $0x240] sm:$0xff]
  %v91 = vld [vmem:[%s1 + $0x248] sm:$0xff]
  %v92 = vld [vmem:[%s1 + $0x250] sm:$0xff]
  %v93 = vld [vmem:[%s1 + $0x258] sm:$0xff]
  %v94 = vld [vmem:[%s1 + $0x260] sm:$0xff]
  %v95 = vld [vmem:[%s1 + $0x268] sm:$0xff]
  %v96 = vld [vmem:[%s1 + $0x270] sm:$0xff]
  %v97 = vld [vmem:[%s1 + $0x278] sm:$0xff]
  %v98 = vld [vmem:[%s1 + $0x280] sm:$0xff]
  %v99 = vld [vmem:[%s1 + $0x288] sm:$0xff]
  %v100 = vld [vmem:[%s1 + $0x290] sm:$0xff]
  %v101 = vld [vmem:[%s1 + $0x298] sm:$0xff]
  %v102 = vld [vmem:[%s1 + $0x2a0] sm:$0xff]
  %v103 = vld [vmem:[%s1 + $0x2a8] sm:$0xff]
  %v104 = vld [vmem:[%s1 + $0x2b0] sm:$0xff]
  %v105 = vld [vmem:[%s1 + $0x2b8] sm:$0xff]
  %v106 = vld [vmem:[%s1 + $0x2c0] sm:$0xff]
  %v107 = vld [vmem:[%s1 + $0x2c8] sm:$0xff]
  %v108 = vld [vmem:[%s1 + $0x2d0] sm:$0xff]
  %v109 = vld [vmem:[%s1 + $0x2d8] sm:$0xff]
  %v110 = vld [vmem:[%s1 + $0x2e0] sm:$0xff]
  %v111 = vld [vmem:[%s1 + $0x2e8] sm:$0xff]
  %v112 = vld [vmem:[%s1 + $0x2f0] sm:$0xff]
  %v113 = vld [vmem:[%s1 + $0x2f8] sm:$0xff]
  %v114 = vld [vmem:[%s1 + $0x300] sm:$0xff]
  %v115 = vld [vmem:[%s1 + $0x308] sm:$0xff]
  %v116 = vld [vmem:[%s1 + $0x310] sm:$0xff]
  %v117 = vld [vmem:[%s1 + $0x318] sm:$0xff]
  %v118 = vld [vmem:[%s1 + $0x320] sm:$0xff]
  %v119 = vld [vmem:[%s1 + $0x328] sm:$0xff]
  %v120 = vld [vmem:[%s1 + $0x330] sm:$0xff]
  %v121 = vld [vmem:[%s1 + $0x338] sm:$0xff]
  %v122 = vld [vmem:[%s1 + $0x340] sm:$0xff]
  %v123 = vld [vmem:[%s1 + $0x348] sm:$0xff]
  %v124 = vld [vmem:[%s1 + $0x350] sm:$0xff]
  %v125 = vld [vmem:[%s1 + $0x358] sm:$0xff]
  %v126 = vld [vmem:[%s1 + $0x360] sm:$0xff]
  %v127 = vld [vmem:[%s1 + $0x368] sm:$0xff]
  %v128 = vld [vmem:[%s1 + $0x370] sm:$0xff]
  %v129 = vld [vmem:[%s1 + $0x378] sm:$0xff]
  %v130 = vld [vmem:[%s1 + $0x380] sm:$0xff]
  %v131 = vld [vmem:[%s1 + $0x388] sm:$0xff]
  %v132 = vld [vmem:[%s1 + $0x390] sm:$0xff]
  %v133 = vld [vmem:[%s1 + $0x398] sm:$0xff]
  %v134 = vld [vmem:[%s1 + $0x3a0] sm:$0xff]
  %v135 = vld [vmem:[%s1 + $0x3a8] sm:$0xff]
  %v136 = vld [vmem:[%s1 + $0x3b0] sm:$0xff]
  %v137 = vld [vmem:[%s1 + $0x3b8] sm:$0xff]
  %v138 = vld [vmem:[%s1 + $0x3c0] sm:$0xff]
  %v139 = vld [vmem:[%s1 + $0x3c8] sm:$0xff]
  %v140 = vld [vmem:[%s1 + $0x3d0] sm:$0xff]
  %v141 = vld [vmem:[%s1 + $0x3d8] sm:$0xff]
  %v142 = vld [vmem:[%s1 + $0x3e0] sm:$0xff]
  %v143 = vld [vmem:[%s1 + $0x3e8] sm:$0xff]
  %v144 = vld [vmem:[%s1 + $0x3f0] sm:$0xff]
  %v145 = vld [vmem:[%s1 + $0x3f8] sm:$0xff]
  %v146 = vld [vmem:[%s1 + $0x400] sm:$0xff]
  %v147 = vld [vmem:[%s1 + $0x408] sm:$0xff]
  %v148 = vld [vmem:[%s1 + $0x410] sm:$0xff]
  %v149 = vld [vmem:[%s1 + $0x418] sm:$0xff]
  %v150 = vld [vmem:[%s1 + $0x420] sm:$0xff]
  %v151 = vld [vmem:[%s1 + $0x428] sm:$0xff]
  %v152 = vld [vmem:[%s1 + $0x430] sm:$0xff]
  %v153 = vld [vmem:[%s1 + $0x438] sm:$0xff]
  %v154 = vld [vmem:[%s1 + $0x440] sm:$0xff]
  %v155 = vld [vmem:[%s1 + $0x448] sm:$0xff]
  %v156 = vld [vmem:[%s1 + $0x450] sm:$0xff]
  %v157 = vld [vmem:[%s1 + $0x458] sm:$0xff]
  %v158 = vld [vmem:[%s1 + $0x460] sm:$0xff]
  %v159 = vld [vmem:[%s1 + $0x468] sm:$0xff]
  %v160 = vld [vmem:[%s1 + $0x470] sm:$0xff]
  %v161 = vld [vmem:[%s1 + $0x478] sm:$0xff]
  %v162 = vld [vmem:[%s1 + $0x480] sm:$0xff]
  %v163 = vld [vmem:[%s1 + $0x488] sm:$0xff]
  %v164 = vld [vmem:[%s1 + $0x490] sm:$0xff]
  %v165 = vld [vmem:[%s1 + $0x498] sm:$0xff]
  %v166 = vld [vmem:[%s1 + $0x4a0] sm:$0xff]
  %v167 = vld [vmem:[%s1 + $0x4a8] sm:$0xff]
  %v168 = vld [vmem:[%s1 + $0x4b0] sm:$0xff]
  %v169 = vld [vmem:[%s1 + $0x4b8] sm:$0xff]
  %v170 = vld [vmem:[%s1 + $0x4c0] sm:$0xff]
  %v171 = vld [vmem:[%s1 + $0x4c8] sm:$0xff]
  %v172 = vld [vmem:[%s1 + $0x4d0] sm:$0xff]
  %v173 = vld [vmem:[%s1 + $0x4d8] sm:$0xff]
  %v174 = vld [vmem:[%s1 + $0x4e0] sm:$0xff]
  %v175 = vld [vmem:[%s1 + $0x4e8] sm:$0xff]
  %v176 = vld [vmem:[%s1 + $0x4f0] sm:$0xff]
  %v177 = vld [vmem:[%s1 + $0x4f8] sm:$0xff]
  %v178 = vld [vmem:[%s1 + $0x500] sm:$0xff]
  %v179 = vld [vmem:[%s1 + $0x508] sm:$0xff]
  %v180 = vld [vmem:[%s1 + $0x510] sm:$0xff]
  %v181 = vld [vmem:[%s1 + $0x518] sm:$0xff]
  %v182 = vld [vmem:[%s1 + $0x520] sm:$0xff]
  %v183 = vld [vmem:[%s1 + $0x528] sm:$0xff]
  %v184 = vld [vmem:[%s1 + $0x530] sm:$0xff]
  %v185 = vld [vmem:[%s1 + $0x538] sm:$0xff]
  %v186 = vld [vmem:[%s1 + $0x540] sm:$0xff]
  %v187 = vld [vmem:[%s1 + $0x548] sm:$0xff]
  %v188 = vld [vmem:[%s1 + $0x550] sm:$0xff]
  %v189 = vld [vmem:[%s1 + $0x558] sm:$0xff]
  %v190 = vld [vmem:[%s1 + $0x560] sm:$0xff]
  %v191 = vld [vmem:[%s1 + $0x568] sm:$0xff]
  %v192 = vld [vmem:[%s1 + $0x570] sm:$0xff]
  %v193 = vld [vmem:[%s1 + $0x578] sm:$0xff]
  %v194 = vld [vmem:[%s1 + $0x580] sm:$0xff]
  %v195 = vld [vmem:[%s1 + $0x588] sm:$0xff]
  %v196 = vld [vmem:[%s1 + $0x590] sm:$0xff]
  %v197 = vld [vmem:[%s1 + $0x598] sm:$0xff]
  %v198 = vld [vmem:[%s1 + $0x5a0] sm:$0xff]
  %v199 = vld [vmem:[%s1 + $0x5a8] sm:$0xff]
  %v200 = vld [vmem:[%s1 + $0x5b0] sm:$0xff]
  %v201 = vld [vmem:[%s1 + $0x5b8] sm:$0xff]
  %v202 = vld [vmem:[%s1 + $0x5c0] sm:$0xff]
  %v203 = vld [vmem:[%s1 + $0x5c8] sm:$0xff]
  %v204 = vld [vmem:[%s1 + $0x5d0] sm:$0xff]
  %v205 = vld [vmem:[%s1 + $0x5d8] sm:$0xff]
  %v206 = vld [vmem:[%s1 + $0x5e0] sm:$0xff]
  %v207 = vld [vmem:[%s1 + $0x5e8] sm:$0xff]
  %v208 = vld [vmem:[%s1 + $0x5f0] sm:$0xff]
  %v209 = vld [vmem:[%s1 + $0x5f8] sm:$0xff]
  %v210 = vld [vmem:[%s1 + $0x600] sm:$0xff]
  %v211 = vld [vmem:[%s1 + $0x608] sm:$0xff]
  %v212 = vld [vmem:[%s1 + $0x610] sm:$0xff]
  %v213 = vld [vmem:[%s1 + $0x618] sm:$0xff]
  %v214 = vld [vmem:[%s1 + $0x620] sm:$0xff]
  %v215 = vld [vmem:[%s1 + $0x628] sm:$0xff]
  %v216 = vld [vmem:[%s1 + $0x630] sm:$0xff]
  %v217 = vld [vmem:[%s1 + $0x638] sm:$0xff]
  %v218 = vld [vmem:[%s1 + $0x640] sm:$0xff]
  %v219 = vld [vmem:[%s1 + $0x648] sm:$0xff]
  %v220 = vld [vmem:[%s1 + $0x650] sm:$0xff]
  %v221 = vld [vmem:[%s1 + $0x658] sm:$0xff]
  %v222 = vld [vmem:[%s1 + $0x660] sm:$0xff]
  %v223 = vld [vmem:[%s1 + $0x668] sm:$0xff]
  %v224 = vld [vmem:[%s1 + $0x670] sm:$0xff]
  %v225 = vld [vmem:[%s1 + $0x678] sm:$0xff]
  %v226 = vld [vmem:[%s1 + $0x680] sm:$0xff]
  %v227 = vld [vmem:[%s1 + $0x688] sm:$0xff]
  %v228 = vld [vmem:[%s1 + $0x690] sm:$0xff]
  %v229 = vld [vmem:[%s1 + $0x698] sm:$0xff]
  %v230 = vld [vmem:[%s1 + $0x6a0] sm:$0xff]
  %v231 = vld [vmem:[%s1 + $0x6a8] sm:$0xff]
  %v232 = vld [vmem:[%s1 + $0x6b0] sm:$0xff]
  %v233 = vld [vmem:[%s1 + $0x6b8] sm:$0xff]
  %v234 = vld [vmem:[%s1 + $0x6c0] sm:$0xff]
  %v235 = vld [vmem:[%s1 + $0x6c8] sm:$0xff]
  %v236 = vld [vmem:[%s1 + $0x6d0] sm:$0xff]
  %v237 = vld [vmem:[%s1 + $0x6d8] sm:$0xff]
  %v238 = vld [vmem:[%s1 + $0x6e0] sm:$0xff]
  %v239 = vld [vmem:[%s1 + $0x6e8] sm:$0xff]
  %v240 = vld [vmem:[%s1 + $0x6f0] sm:$0xff]
  %v241 = vld [vmem:[%s1 + $0x6f8] sm:$0xff]
  %v242 = vld [vmem:[%s1 + $0x700] sm:$0xff]
  %v243 = vld [vmem:[%s1 + $0x708] sm:$0xff]
  %v244 = vld [vmem:[%s1 + $0x710] sm:$0xff]
  %v245 = vld [vmem:[%s1 + $0x718] sm:$0xff]
  %v246 = vld [vmem:[%s1 + $0x720] sm:$0xff]
  %v247 = vld [vmem:[%s1 + $0x728] sm:$0xff]
  %v248 = vld [vmem:[%s1 + $0x730] sm:$0xff]
  %v249 = vld [vmem:[%s1 + $0x738] sm:$0xff]
  %v250 = vld [vmem:[%s1 + $0x740] sm:$0xff]
  %v251 = vld [vmem:[%s1 + $0x748] sm:$0xff]
  %v252 = vld [vmem:[%s1 + $0x750] sm:$0xff]
  %v253 = vld [vmem:[%s1 + $0x758] sm:$0xff]
  %v254 = vld [vmem:[%s1 + $0x760] sm:$0xff]
  %v255 = vld [vmem:[%s1 + $0x768] sm:$0xff]
  %v256 = vld [vmem:[%s1 + $0x770] sm:$0xff]
  %v257 = vld [vmem:[%s1 + $0x778] sm:$0xff]
  %v258 = vld [vmem:[%s1 + $0x780] sm:$0xff]
  %v259 = vld [vmem:[%s1 + $0x788] sm:$0xff]
  %v260 = vld [vmem:[%s1 + $0x790] sm:$0xff]
  %v261 = vld [vmem:[%s1 + $0x798] sm:$0xff]
  %v262 = vld [vmem:[%s1 + $0x7a0] sm:$0xff]
  %v263 = vld [vmem:[%s1 + $0x7a8] sm:$0xff]
  %v264 = vld [vmem:[%s1 + $0x7b0] sm:$0xff]
  %v265 = vld [vmem:[%s1 + $0x7b8] sm:$0xff]
  %v266 = vld [vmem:[%s1 + $0x7c0] sm:$0xff]
  %v267 = vld [vmem:[%s1 + $0x7c8] sm:$0xff]
  %v268 = vld [vmem:[%s1 + $0x7d0] sm:$0xff]
  %v269 = vld [vmem:[%s1 + $0x7d8] sm:$0xff]
  %v270 = vld [vmem:[%s1 + $0x7e0] sm:$0xff]
  %v271 = vld [vmem:[%s1 + $0x7e8] sm:$0xff]
  %v272 = vld [vmem:[%s1 + $0x7f0] sm:$0xff]
  %v273 = vld [vmem:[%s1 + $0x7f8] sm:$0xff]
  %v274 = vld [vmem:[%s1 + $0x800] sm:$0xff]
  %v275 = vld [vmem:[%s1 + $0x808] sm:$0xff]
  %v276 = vld [vmem:[%s1 + $0x810] sm:$0xff]
  %v277 = vld [vmem:[%s1 + $0x818] sm:$0xff]
  %v278 = vld [vmem:[%s1 + $0x820] sm:$0xff]
  %v279 = vld [vmem:[%s1 + $0x828] sm:$0xff]
  %v280 = vld [vmem:[%s1 + $0x830] sm:$0xff]
  %v281 = vld [vmem:[%s1 + $0x838] sm:$0xff]
  %v282 = vld [vmem:[%s1 + $0x840] sm:$0xff]
  %v283 = vld [vmem:[%s1 + $0x848] sm:$0xff]
  %v284 = vld [vmem:[%s1 + $0x850] sm:$0xff]
  %v285 = vld [vmem:[%s1 + $0x858] sm:$0xff]
  %v286 = vld [vmem:[%s1 + $0x860] sm:$0xff]
  %v287 = vld [vmem:[%s1 + $0x868] sm:$0xff]
  %v288 = vld [vmem:[%s1 + $0x870] sm:$0xff]
  %v289 = vld [vmem:[%s1 + $0x878] sm:$0xff]
  %v290 = vld [vmem:[%s1 + $0x880] sm:$0xff]
  %v291 = vld [vmem:[%s1 + $0x888] sm:$0xff]
  %v292 = vld [vmem:[%s1 + $0x890] sm:$0xff]
  %v293 = vld [vmem:[%s1 + $0x898] sm:$0xff]
  %v294 = vld [vmem:[%s1 + $0x8a0] sm:$0xff]
  %v295 = vld [vmem:[%s1 + $0x8a8] sm:$0xff]
  %v296 = vld [vmem:[%s1 + $0x8b0] sm:$0xff]
  %v297 = vld [vmem:[%s1 + $0x8b8] sm:$0xff]
  %v298 = vld [vmem:[%s1 + $0x8c0] sm:$0xff]
  %v299 = vld [vmem:[%s1 + $0x8c8] sm:$0xff]
  %v300 = vld [vmem:[%s1 + $0x8d0] sm:$0xff]
  %v301 = vld [vmem:[%s1 + $0x8d8] sm:$0xff]
  %v302 = vld [vmem:[%s1 + $0x8e0] sm:$0xff]
  %v303 = vld [vmem:[%s1 + $0x8e8] sm:$0xff]
  %v304 = vld [vmem:[%s1 + $0x8f0] sm:$0xff]
  %v305 = vld [vmem:[%s1 + $0x8f8] sm:$0xff]
  %v306 = vld [vmem:[%s1 + $0x900] sm:$0xff]
  %v307 = vld [vmem:[%s1 + $0x908] sm:$0xff]
  %v308 = vld [vmem:[%s1 + $0x910] sm:$0xff]
  %v309 = vld [vmem:[%s1 + $0x918] sm:$0xff]
  %v310 = vld [vmem:[%s1 + $0x920] sm:$0xff]
  %v311 = vld [vmem:[%s1 + $0x928] sm:$0xff]
  %v312 = vld [vmem:[%s1 + $0x930] sm:$0xff]
  %v313 = vld [vmem:[%s1 + $0x938] sm:$0xff]
  %v314 = vld [vmem:[%s1 + $0x940] sm:$0xff]
  %v315 = vld [vmem:[%s1 + $0x948] sm:$0xff]
  %v316 = vld [vmem:[%s1 + $0x950] sm:$0xff]
  %v317 = vld [vmem:[%s1 + $0x958] sm:$0xff]
  %v318 = vld [vmem:[%s1 + $0x960] sm:$0xff]
  %v319 = vld [vmem:[%s1 + $0x968] sm:$0xff]
  %v320 = vld [vmem:[%s1 + $0x970] sm:$0xff]
  %v321 = vld [vmem:[%s1 + $0x978] sm:$0xff]
  %v322 = vld [vmem:[%s1 + $0x980] sm:$0xff]
  %v323 = vld [vmem:[%s1 + $0x988] sm:$0xff]
  %v324 = vld [vmem:[%s1 + $0x990] sm:$0xff]
  %v325 = vld [vmem:[%s1 + $0x998] sm:$0xff]
  %v326 = vld [vmem:[%s1 + $0x9a0] sm:$0xff]
  %v327 = vld [vmem:[%s1 + $0x9a8] sm:$0xff]
  %v328 = vld [vmem:[%s1 + $0x9b0] sm:$0xff]
  %v329 = vld [vmem:[%s1 + $0x9b8] sm:$0xff]
  %v330 = vld [vmem:[%s1 + $0x9c0] sm:$0xff]
  %v331 = vld [vmem:[%s1 + $0x9c8] sm:$0xff]
  %v332 = vld [vmem:[%s1 + $0x9d0] sm:$0xff]
  %v333 = vld [vmem:[%s1 + $0x9d8] sm:$0xff]
  %v334 = vld [vmem:[%s1 + $0x9e0] sm:$0xff]
  %v335 = vld [vmem:[%s1 + $0x9e8] sm:$0xff]
  %v336 = vld [vmem:[%s1 + $0x9f0] sm:$0xff]
  %v337 = vld [vmem:[%s1 + $0x9f8] sm:$0xff]
  %v338 = vld [vmem:[%s1 + $0xa00] sm:$0xff]
  %v339 = vld [vmem:[%s1 + $0xa08] sm:$0xff]
  %v340 = vld [vmem:[%s1 + $0xa10] sm:$0xff]
  %v341 = vld [vmem:[%s1 + $0xa18] sm:$0xff]
  %v342 = vld [vmem:[%s1 + $0xa20] sm:$0xff]
  %v343 = vld [vmem:[%s1 + $0xa28] sm:$0xff]
  %v344 = vld [vmem:[%s1 + $0xa30] sm:$0xff]
  %v345 = vld [vmem:[%s1 + $0xa38] sm:$0xff]
  %v346 = vld [vmem:[%s1 + $0xa40] sm:$0xff]
  %v347 = vld [vmem:[%s1 + $0xa48] sm:$0xff]
  %v348 = vld [vmem:[%s1 + $0xa50] sm:$0xff]
  %v349 = vld [vmem:[%s1 + $0xa58] sm:$0xff]
  %v350 = vld [vmem:[%s1 + $0xa60] sm:$0xff]
  %v351 = vld [vmem:[%s1 + $0xa68] sm:$0xff]
  %v352 = vld [vmem:[%s1 + $0xa70] sm:$0xff]
  %v353 = vld [vmem:[%s1 + $0xa78] sm:$0xff]
  %v354 = vld [vmem:[%s1 + $0xa80] sm:$0xff]
  %v355 = vld [vmem:[%s1 + $0xa88] sm:$0xff]
  %v356 = vld [vmem:[%s1 + $0xa90] sm:$0xff]
  %v357 = vld [vmem:[%s1 + $0xa98] sm:$0xff]
  %v358 = vld [vmem:[%s1 + $0xaa0] sm:$0xff]
  %v359 = vld [vmem:[%s1 + $0xaa8] sm:$0xff]
  %v360 = vld [vmem:[%s1 + $0xab0] sm:$0xff]
  %v361 = vld [vmem:[%s1 + $0xab8] sm:$0xff]
  %v362 = vld [vmem:[%s1 + $0xac0] sm:$0xff]
  %v363 = vld [vmem:[%s1 + $0xac8] sm:$0xff]
  %v364 = vld [vmem:[%s1 + $0xad0] sm:$0xff]
  %v365 = vld [vmem:[%s1 + $0xad8] sm:$0xff]
  %v366 = vld [vmem:[%s1 + $0xae0] sm:$0xff]
  %v367 = vld [vmem:[%s1 + $0xae8] sm:$0xff]
  %v368 = vld [vmem:[%s1 + $0xaf0] sm:$0xff]
  %v369 = vld [vmem:[%s1 + $0xaf8] sm:$0xff]
  %v370 = vld [vmem:[%s1 + $0xb00] sm:$0xff]
  %v371 = vld [vmem:[%s1 + $0xb08] sm:$0xff]
  %v372 = vld [vmem:[%s1 + $0xb10] sm:$0xff]
  %v373 = vld [vmem:[%s1 + $0xb18] sm:$0xff]
  %v374 = vld [vmem:[%s1 + $0xb20] sm:$0xff]
  %v375 = vld [vmem:[%s1 + $0xb28] sm:$0xff]
  %v376 = vld [vmem:[%s1 + $0xb30] sm:$0xff]
  %v377 = vld [vmem:[%s1 + $0xb38] sm:$0xff]
  %v378 = vld [vmem:[%s1 + $0xb40] sm:$0xff]
  %v379 = vld [vmem:[%s1 + $0xb48] sm:$0xff]
  %v380 = vld [vmem:[%s1 + $0xb50] sm:$0xff]
  %v381 = vld [vmem:[%s1 + $0xb58] sm:$0xff]
  %v382 = vld [vmem:[%s1 + $0xb60] sm:$0xff]
  %v383 = vld [vmem:[%s1 + $0xb68] sm:$0xff]
  %v384 = vld [vmem:[%s1 + $0xb70] sm:$0xff]
  %v385 = vld [vmem:[%s1 + $0xb78] sm:$0xff]
  %v386 = vld [vmem:[%s1 + $0xb80] sm:$0xff]
  %v387 = vld [vmem:[%s1 + $0xb88] sm:$0xff]
  %v388 = vld [vmem:[%s1 + $0xb90] sm:$0xff]
  %v389 = vld [vmem:[%s1 + $0xb98] sm:$0xff]
  %v390 = vld [vmem:[%s1 + $0xba0] sm:$0xff]
  %v391 = vld [vmem:[%s1 + $0xba8] sm:$0xff]
  %v392 = vld [vmem:[%s1 + $0xbb0] sm:$0xff]
  %v393 = vld [vmem:[%s1 + $0xbb8] sm:$0xff]
  %v394 = vld [vmem:[%s1 + $0xbc0] sm:$0xff]
  %v395 = vld [vmem:[%s1 + $0xbc8] sm:$0xff]
  %v396 = vld [vmem:[%s1 + $0xbd0] sm:$0xff]
  %v397 = vld [vmem:[%s1 + $0xbd8] sm:$0xff]
  %v398 = vld [vmem:[%s1 + $0xbe0] sm:$0xff]
  %v399 = vld [vmem:[%s1 + $0xbe8] sm:$0xff]
  %v400 = vld [vmem:[%s1 + $0xbf0] sm:$0xff]
  %v401 = vld [vmem:[%s1 + $0xbf8] sm:$0xff]
  %v402 = vld [vmem:[%s1 + $0xc00] sm:$0xff]
  %v403 = vld [vmem:[%s1 + $0xc08] sm:$0xff]
  %v404 = vld [vmem:[%s1 + $0xc10] sm:$0xff]
  %v405 = vld [vmem:[%s1 + $0xc18] sm:$0xff]
  %v406 = vld [vmem:[%s1 + $0xc20] sm:$0xff]
  %v407 = vld [vmem:[%s1 + $0xc28] sm:$0xff]
  %v408 = vld [vmem:[%s1 + $0xc30] sm:$0xff]
  %v409 = vld [vmem:[%s1 + $0xc38] sm:$0xff]
  %v410 = vld [vmem:[%s1 + $0xc40] sm:$0xff]
  %v411 = vld [vmem:[%s1 + $0xc48] sm:$0xff]
  %v412 = vld [vmem:[%s1 + $0xc50] sm:$0xff]
  %v413 = vld [vmem:[%s1 + $0xc58] sm:$0xff]
  %v414 = vld [vmem:[%s1 + $0xc60] sm:$0xff]
  %v415 = vld [vmem:[%s1 + $0xc68] sm:$0xff]
  %v416 = vld [vmem:[%s1 + $0xc70] sm:$0xff]
  %v417 = vld [vmem:[%s1 + $0xc78] sm:$0xff]
  %v418 = vld [vmem:[%s1 + $0xc80] sm:$0xff]
  %v419 = vld [vmem:[%s1 + $0xc88] sm:$0xff]
  %v420 = vld [vmem:[%s1 + $0xc90] sm:$0xff]
  %v421 = vld [vmem:[%s1 + $0xc98] sm:$0xff]
  %v422 = vld [vmem:[%s1 + $0xca0] sm:$0xff]
  %v423 = vld [vmem:[%s1 + $0xca8] sm:$0xff]
  %v424 = vld [vmem:[%s1 + $0xcb0] sm:$0xff]
  %v425 = vld [vmem:[%s1 + $0xcb8] sm:$0xff]
  %v426 = vld [vmem:[%s1 + $0xcc0] sm:$0xff]
  %v427 = vld [vmem:[%s1 + $0xcc8] sm:$0xff]
  %v428 = vld [vmem:[%s1 + $0xcd0] sm:$0xff]
  %v429 = vld [vmem:[%s1 + $0xcd8] sm:$0xff]
  %v430 = vld [vmem:[%s1 + $0xce0] sm:$0xff]
  %v431 = vld [vmem:[%s1 + $0xce8] sm:$0xff]
  %v432 = vld [vmem:[%s1 + $0xcf0] sm:$0xff]
  %v433 = vld [vmem:[%s1 + $0xcf8] sm:$0xff]
  %v434 = vld [vmem:[%s1 + $0xd00] sm:$0xff]
  %v435 = vld [vmem:[%s1 + $0xd08] sm:$0xff]
  %v436 = vld [vmem:[%s1 + $0xd10] sm:$0xff]
  %v437 = vld [vmem:[%s1 + $0xd18] sm:$0xff]
  %v438 = vld [vmem:[%s1 + $0xd20] sm:$0xff]
  %v439 = vld [vmem:[%s1 + $0xd28] sm:$0xff]
  %v440 = vld [vmem:[%s1 + $0xd30] sm:$0xff]
  %v441 = vld [vmem:[%s1 + $0xd38] sm:$0xff]
  %v442 = vld [vmem:[%s1 + $0xd40] sm:$0xff]
  %v443 = vld [vmem:[%s1 + $0xd48] sm:$0xff]
  %v444 = vld [vmem:[%s1 + $0xd50] sm:$0xff]
  %v445 = vld [vmem:[%s1 + $0xd58] sm:$0xff]
  %v446 = vld [vmem:[%s1 + $0xd60] sm:$0xff]
  %v447 = vld [vmem:[%s1 + $0xd68] sm:$0xff]
  %v448 = vld [vmem:[%s1 + $0xd70] sm:$0xff]
  %v449 = vld [vmem:[%s1 + $0xd78] sm:$0xff]
  %v450 = vld [vmem:[%s1 + $0xd80] sm:$0xff]
  %v451 = vld [vmem:[%s1 + $0xd88] sm:$0xff]
  %v452 = vld [vmem:[%s1 + $0xd90] sm:$0xff]
  %v453 = vld [vmem:[%s1 + $0xd98] sm:$0xff]
  %v454 = vld [vmem:[%s1 + $0xda0] sm:$0xff]
  %v455 = vld [vmem:[%s1 + $0xda8] sm:$0xff]
  %v456 = vld [vmem:[%s1 + $0xdb0] sm:$0xff]
  %v457 = vld [vmem:[%s1 + $0xdb8] sm:$0xff]
  %v458 = vld [vmem:[%s1 + $0xdc0] sm:$0xff]
  %v459 = vld [vmem:[%s1 + $0xdc8] sm:$0xff]
  %v460 = vld [vmem:[%s1 + $0xdd0] sm:$0xff]
  %v461 = vld [vmem:[%s1 + $0xdd8] sm:$0xff]
  %v462 = vld [vmem:[%s1 + $0xde0] sm:$0xff]
  %v463 = vld [vmem:[%s1 + $0xde8] sm:$0xff]
  %v464 = vld [vmem:[%s1 + $0xdf0] sm:$0xff]
  %v465 = vld [vmem:[%s1 + $0xdf8] sm:$0xff]
  %v466 = vld [vmem:[%s1 + $0xe00] sm:$0xff]
  %v467 = vld [vmem:[%s1 + $0xe08] sm:$0xff]
  %v468 = vld [vmem:[%s1 + $0xe10] sm:$0xff]
  %v469 = vld [vmem:[%s1 + $0xe18] sm:$0xff]
  %v470 = vld [vmem:[%s1 + $0xe20] sm:$0xff]
  %v471 = vld [vmem:[%s1 + $0xe28] sm:$0xff]
  %v472 = vld [vmem:[%s1 + $0xe30] sm:$0xff]
  %v473 = vld [vmem:[%s1 + $0xe38] sm:$0xff]
  %v474 = vld [vmem:[%s1 + $0xe40] sm:$0xff]
  %v475 = vld [vmem:[%s1 + $0xe48] sm:$0xff]
  %v476 = vld [vmem:[%s1 + $0xe50] sm:$0xff]
  %v477 = vld [vmem:[%s1 + $0xe58] sm:$0xff]
  %v478 = vld [vmem:[%s1 + $0xe60] sm:$0xff]
  %v479 = vld [vmem:[%s1 + $0xe68] sm:$0xff]
  %v480 = vld [vmem:[%s1 + $0xe70] sm:$0xff]
  %v481 = vld [vmem:[%s1 + $0xe78] sm:$0xff]
  %v482 = vld [vmem:[%s1 + $0xe80] sm:$0xff]
  %v483 = vld [vmem:[%s1 + $0xe88] sm:$0xff]
  %v484 = vld [vmem:[%s1 + $0xe90] sm:$0xff]
  %v485 = vld [vmem:[%s1 + $0xe98] sm:$0xff]
  %v486 = vld [vmem:[%s1 + $0xea0] sm:$0xff]
  %v487 = vld [vmem:[%s1 + $0xea8] sm:$0xff]
  %v488 = vld [vmem:[%s1 + $0xeb0] sm:$0xff]
  %v489 = vld [vmem:[%s1 + $0xeb8] sm:$0xff]
  %v490 = vld [vmem:[%s1 + $0xec0] sm:$0xff]
  %v491 = vld [vmem:[%s1 + $0xec8] sm:$0xff]
  %v492 = vld [vmem:[%s1 + $0xed0] sm:$0xff]
  %v493 = vld [vmem:[%s1 + $0xed8] sm:$0xff]
  %v494 = vld [vmem:[%s1 + $0xee0] sm:$0xff]
  %v495 = vld [vmem:[%s1 + $0xee8] sm:$0xff]
  %v496 = vld [vmem:[%s1 + $0xef0] sm:$0xff]
  %v497 = vld [vmem:[%s1 + $0xef8] sm:$0xff]
  %v498 = vld [vmem:[%s1 + $0xf00] sm:$0xff]
  %v499 = vld [vmem:[%s1 + $0xf08] sm:$0xff]
  %v500 = vld [vmem:[%s1 + $0xf10] sm:$0xff]
  %v501 = vld [vmem:[%s1 + $0xf18] sm:$0xff]
  %v502 = vld [vmem:[%s1 + $0xf20] sm:$0xff]
  %v503 = vld [vmem:[%s1 + $0xf28] sm:$0xff]
  %v504 = vld [vmem:[%s1 + $0xf30] sm:$0xff]
  %v505 = vld [vmem:[%s1 + $0xf38] sm:$0xff]
  %v506 = vld [vmem:[%s1 + $0xf40] sm:$0xff]
  %v507 = vld [vmem:[%s1 + $0xf48] sm:$0xff]
  %v508 = vld [vmem:[%s1 + $0xf50] sm:$0xff]
  %v509 = vld [vmem:[%s1 + $0xf58] sm:$0xff]
  %v510 = vld [vmem:[%s1 + $0xf60] sm:$0xff]
  %v511 = vld [vmem:[%s1 + $0xf68] sm:$0xff]
  %v512 = vld [vmem:[%s1 + $0xf70] sm:$0xff]
  %v513 = vld [vmem:[%s1 + $0xf78] sm:$0xff]
  %v514 = vld [vmem:[%s1 + $0xf80] sm:$0xff]
  %v515 = vld [vmem:[%s1 + $0xf88] sm:$0xff]
  %v516 = vld [vmem:[%s1 + $0xf90] sm:$0xff]
  %v517 = vld [vmem:[%s1 + $0xf98] sm:$0xff]
  %v518 = vld [vmem:[%s1 + $0xfa0] sm:$0xff]
  %v519 = vld [vmem:[%s1 + $0xfa8] sm:$0xff]
  %v520 = vld [vmem:[%s1 + $0xfb0] sm:$0xff]
  %v521 = vld [vmem:[%s1 + $0xfb8] sm:$0xff]
  %v522 = vld [vmem:[%s1 + $0xfc0] sm:$0xff]
  %v523 = vld [vmem:[%s1 + $0xfc8] sm:$0xff]
  %v524 = vld [vmem:[%s1 + $0xfd0] sm:$0xff]
  %v525 = vld [vmem:[%s1 + $0xfd8] sm:$0xff]
  %v526 = vld [vmem:[%s1 + $0xfe0] sm:$0xff]
  %v527 = vld [vmem:[%s1 + $0xfe8] sm:$0xff]
  %v528 = vld [vmem:[%s1 + $0xff0] sm:$0xff]
  %v529 = vld [vmem:[%s1 + $0xff8] sm:$0xff]
  %v530 = vld [vmem:[%s2] sm:$0xff]
  %v532 = vlaneseq
  %v533 = vshrl.u32 %v532, 7
  %v534 = vsub.s32 0, %v533
  %v535 = vrot.slane %v530, %v534
  %v536 = vlaneseq
  %v537 = vshrl.u32 %v536, 7
  %v538 = vsub.s32 1, %v537
  %v539 = vrot.slane %v530, %v538
  %v540 = vlaneseq
  %v541 = vshrl.u32 %v540, 7
  %v542 = vsub.s32 2, %v541
  %v543 = vrot.slane %v530, %v542
  %v544 = vlaneseq
  %v545 = vshrl.u32 %v544, 7
  %v546 = vsub.s32 3, %v545
  %v547 = vrot.slane %v530, %v546
  %v548 = vlaneseq
  %v549 = vshrl.u32 %v548, 7
  %v550 = vsub.s32 4, %v549
  %v551 = vrot.slane %v530, %v550
  %v552 = vlaneseq
  %v553 = vshrl.u32 %v552, 7
  %v554 = vsub.s32 5, %v553
  %v555 = vrot.slane %v530, %v554
  %v556 = vlaneseq
  %v557 = vshrl.u32 %v556, 7
  %v558 = vsub.s32 6, %v557
  %v559 = vrot.slane %v530, %v558
  %v560 = vlaneseq
  %v561 = vshrl.u32 %v560, 7
  %v562 = vsub.s32 7, %v561
  %v563 = vrot.slane %v530, %v562
  %v576 = vunpack.c.l.b16 %v14
  %v577 = vunpack.c.h.b16 %v14
  %v578 = vunpack.c.l.b16 %v15
  %v579 = vunpack.c.h.b16 %v15
  %v580 = vunpack.c.l.b16 %v16
  %v581 = vunpack.c.h.b16 %v16
  %v582 = vunpack.c.l.b16 %v17
  %v583 = vunpack.c.h.b16 %v17
  %v584 = vpack.c.b16 %v576, %v576
  %v585 = vpack.c.b16 %v577, %v577
  %v586 = vpack.c.b16 %v578, %v578
  %v587 = vpack.c.b16 %v579, %v579
  %v588 = vpack.c.b16 %v580, %v580
  %v589 = vpack.c.b16 %v581, %v581
  %v590 = vpack.c.b16 %v582, %v582
  %v591 = vpack.c.b16 %v583, %v583
  %v1112 = vunpack.c.l.b16 %v18
  %v1113 = vunpack.c.h.b16 %v18
  %v1114 = vunpack.c.l.b16 %v19
  %v1115 = vunpack.c.h.b16 %v19
  %v1116 = vunpack.c.l.b16 %v20
  %v1117 = vunpack.c.h.b16 %v20
  %v1118 = vunpack.c.l.b16 %v21
  %v1119 = vunpack.c.h.b16 %v21
  %v1120 = vunpack.c.l.b16 %v22
  %v1121 = vunpack.c.h.b16 %v22
  %v1122 = vunpack.c.l.b16 %v23
  %v1123 = vunpack.c.h.b16 %v23
  %v1124 = vunpack.c.l.b16 %v24
  %v1125 = vunpack.c.h.b16 %v24
  %v1126 = vunpack.c.l.b16 %v25
  %v1127 = vunpack.c.h.b16 %v25
  %v1128 = vunpack.c.l.b16 %v26
  %v1129 = vunpack.c.h.b16 %v26
  %v1130 = vunpack.c.l.b16 %v27
  %v1131 = vunpack.c.h.b16 %v27
  %v1132 = vunpack.c.l.b16 %v28
  %v1133 = vunpack.c.h.b16 %v28
  %v1134 = vunpack.c.l.b16 %v29
  %v1135 = vunpack.c.h.b16 %v29
  %v1136 = vunpack.c.l.b16 %v30
  %v1137 = vunpack.c.h.b16 %v30
  %v1138 = vunpack.c.l.b16 %v31
  %v1139 = vunpack.c.h.b16 %v31
  %v1140 = vunpack.c.l.b16 %v32
  %v1141 = vunpack.c.h.b16 %v32
  %v1142 = vunpack.c.l.b16 %v33
  %v1143 = vunpack.c.h.b16 %v33
  %v1144 = vunpack.c.l.b16 %v34
  %v1145 = vunpack.c.h.b16 %v34
  %v1146 = vunpack.c.l.b16 %v35
  %v1147 = vunpack.c.h.b16 %v35
  %v1148 = vunpack.c.l.b16 %v36
  %v1149 = vunpack.c.h.b16 %v36
  %v1150 = vunpack.c.l.b16 %v37
  %v1151 = vunpack.c.h.b16 %v37
  %v1152 = vunpack.c.l.b16 %v38
  %v1153 = vunpack.c.h.b16 %v38
  %v1154 = vunpack.c.l.b16 %v39
  %v1155 = vunpack.c.h.b16 %v39
  %v1156 = vunpack.c.l.b16 %v40
  %v1157 = vunpack.c.h.b16 %v40
  %v1158 = vunpack.c.l.b16 %v41
  %v1159 = vunpack.c.h.b16 %v41
  %v1160 = vunpack.c.l.b16 %v42
  %v1161 = vunpack.c.h.b16 %v42
  %v1162 = vunpack.c.l.b16 %v43
  %v1163 = vunpack.c.h.b16 %v43
  %v1164 = vunpack.c.l.b16 %v44
  %v1165 = vunpack.c.h.b16 %v44
  %v1166 = vunpack.c.l.b16 %v45
  %v1167 = vunpack.c.h.b16 %v45
  %v1168 = vunpack.c.l.b16 %v46
  %v1169 = vunpack.c.h.b16 %v46
  %v1170 = vunpack.c.l.b16 %v47
  %v1171 = vunpack.c.h.b16 %v47
  %v1172 = vunpack.c.l.b16 %v48
  %v1173 = vunpack.c.h.b16 %v48
  %v1174 = vunpack.c.l.b16 %v49
  %v1175 = vunpack.c.h.b16 %v49
  %v1176 = vunpack.c.l.b16 %v50
  %v1177 = vunpack.c.h.b16 %v50
  %v1178 = vunpack.c.l.b16 %v51
  %v1179 = vunpack.c.h.b16 %v51
  %v1180 = vunpack.c.l.b16 %v52
  %v1181 = vunpack.c.h.b16 %v52
  %v1182 = vunpack.c.l.b16 %v53
  %v1183 = vunpack.c.h.b16 %v53
  %v1184 = vunpack.c.l.b16 %v54
  %v1185 = vunpack.c.h.b16 %v54
  %v1186 = vunpack.c.l.b16 %v55
  %v1187 = vunpack.c.h.b16 %v55
  %v1188 = vunpack.c.l.b16 %v56
  %v1189 = vunpack.c.h.b16 %v56
  %v1190 = vunpack.c.l.b16 %v57
  %v1191 = vunpack.c.h.b16 %v57
  %v1192 = vunpack.c.l.b16 %v58
  %v1193 = vunpack.c.h.b16 %v58
  %v1194 = vunpack.c.l.b16 %v59
  %v1195 = vunpack.c.h.b16 %v59
  %v1196 = vunpack.c.l.b16 %v60
  %v1197 = vunpack.c.h.b16 %v60
  %v1198 = vunpack.c.l.b16 %v61
  %v1199 = vunpack.c.h.b16 %v61
  %v1200 = vunpack.c.l.b16 %v62
  %v1201 = vunpack.c.h.b16 %v62
  %v1202 = vunpack.c.l.b16 %v63
  %v1203 = vunpack.c.h.b16 %v63
  %v1204 = vunpack.c.l.b16 %v64
  %v1205 = vunpack.c.h.b16 %v64
  %v1206 = vunpack.c.l.b16 %v65
  %v1207 = vunpack.c.h.b16 %v65
  %v1208 = vunpack.c.l.b16 %v66
  %v1209 = vunpack.c.h.b16 %v66
  %v1210 = vunpack.c.l.b16 %v67
  %v1211 = vunpack.c.h.b16 %v67
  %v1212 = vunpack.c.l.b16 %v68
  %v1213 = vunpack.c.h.b16 %v68
  %v1214 = vunpack.c.l.b16 %v69
  %v1215 = vunpack.c.h.b16 %v69
  %v1216 = vunpack.c.l.b16 %v70
  %v1217 = vunpack.c.h.b16 %v70
  %v1218 = vunpack.c.l.b16 %v71
  %v1219 = vunpack.c.h.b16 %v71
  %v1220 = vunpack.c.l.b16 %v72
  %v1221 = vunpack.c.h.b16 %v72
  %v1222 = vunpack.c.l.b16 %v73
  %v1223 = vunpack.c.h.b16 %v73
  %v1224 = vunpack.c.l.b16 %v74
  %v1225 = vunpack.c.h.b16 %v74
  %v1226 = vunpack.c.l.b16 %v75
  %v1227 = vunpack.c.h.b16 %v75
  %v1228 = vunpack.c.l.b16 %v76
  %v1229 = vunpack.c.h.b16 %v76
  %v1230 = vunpack.c.l.b16 %v77
  %v1231 = vunpack.c.h.b16 %v77
  %v1232 = vunpack.c.l.b16 %v78
  %v1233 = vunpack.c.h.b16 %v78
  %v1234 = vunpack.c.l.b16 %v79
  %v1235 = vunpack.c.h.b16 %v79
  %v1236 = vunpack.c.l.b16 %v80
  %v1237 = vunpack.c.h.b16 %v80
  %v1238 = vunpack.c.l.b16 %v81
  %v1239 = vunpack.c.h.b16 %v81
  %v1240 = vunpack.c.l.b16 %v82
  %v1241 = vunpack.c.h.b16 %v82
  %v1242 = vunpack.c.l.b16 %v83
  %v1243 = vunpack.c.h.b16 %v83
  %v1244 = vunpack.c.l.b16 %v84
  %v1245 = vunpack.c.h.b16 %v84
  %v1246 = vunpack.c.l.b16 %v85
  %v1247 = vunpack.c.h.b16 %v85
  %v1248 = vunpack.c.l.b16 %v86
  %v1249 = vunpack.c.h.b16 %v86
  %v1250 = vunpack.c.l.b16 %v87
  %v1251 = vunpack.c.h.b16 %v87
  %v1252 = vunpack.c.l.b16 %v88
  %v1253 = vunpack.c.h.b16 %v88
  %v1254 = vunpack.c.l.b16 %v89
  %v1255 = vunpack.c.h.b16 %v89
  %v1256 = vunpack.c.l.b16 %v90
  %v1257 = vunpack.c.h.b16 %v90
  %v1258 = vunpack.c.l.b16 %v91
  %v1259 = vunpack.c.h.b16 %v91
  %v1260 = vunpack.c.l.b16 %v92
  %v1261 = vunpack.c.h.b16 %v92
  %v1262 = vunpack.c.l.b16 %v93
  %v1263 = vunpack.c.h.b16 %v93
  %v1264 = vunpack.c.l.b16 %v94
  %v1265 = vunpack.c.h.b16 %v94
  %v1266 = vunpack.c.l.b16 %v95
  %v1267 = vunpack.c.h.b16 %v95
  %v1268 = vunpack.c.l.b16 %v96
  %v1269 = vunpack.c.h.b16 %v96
  %v1270 = vunpack.c.l.b16 %v97
  %v1271 = vunpack.c.h.b16 %v97
  %v1272 = vunpack.c.l.b16 %v98
  %v1273 = vunpack.c.h.b16 %v98
  %v1274 = vunpack.c.l.b16 %v99
  %v1275 = vunpack.c.h.b16 %v99
  %v1276 = vunpack.c.l.b16 %v100
  %v1277 = vunpack.c.h.b16 %v100
  %v1278 = vunpack.c.l.b16 %v101
  %v1279 = vunpack.c.h.b16 %v101
  %v1280 = vunpack.c.l.b16 %v102
  %v1281 = vunpack.c.h.b16 %v102
  %v1282 = vunpack.c.l.b16 %v103
  %v1283 = vunpack.c.h.b16 %v103
  %v1284 = vunpack.c.l.b16 %v104
  %v1285 = vunpack.c.h.b16 %v104
  %v1286 = vunpack.c.l.b16 %v105
  %v1287 = vunpack.c.h.b16 %v105
  %v1288 = vunpack.c.l.b16 %v106
  %v1289 = vunpack.c.h.b16 %v106
  %v1290 = vunpack.c.l.b16 %v107
  %v1291 = vunpack.c.h.b16 %v107
  %v1292 = vunpack.c.l.b16 %v108
  %v1293 = vunpack.c.h.b16 %v108
  %v1294 = vunpack.c.l.b16 %v109
  %v1295 = vunpack.c.h.b16 %v109
  %v1296 = vunpack.c.l.b16 %v110
  %v1297 = vunpack.c.h.b16 %v110
  %v1298 = vunpack.c.l.b16 %v111
  %v1299 = vunpack.c.h.b16 %v111
  %v1300 = vunpack.c.l.b16 %v112
  %v1301 = vunpack.c.h.b16 %v112
  %v1302 = vunpack.c.l.b16 %v113
  %v1303 = vunpack.c.h.b16 %v113
  %v1304 = vunpack.c.l.b16 %v114
  %v1305 = vunpack.c.h.b16 %v114
  %v1306 = vunpack.c.l.b16 %v115
  %v1307 = vunpack.c.h.b16 %v115
  %v1308 = vunpack.c.l.b16 %v116
  %v1309 = vunpack.c.h.b16 %v116
  %v1310 = vunpack.c.l.b16 %v117
  %v1311 = vunpack.c.h.b16 %v117
  %v1312 = vunpack.c.l.b16 %v118
  %v1313 = vunpack.c.h.b16 %v118
  %v1314 = vunpack.c.l.b16 %v119
  %v1315 = vunpack.c.h.b16 %v119
  %v1316 = vunpack.c.l.b16 %v120
  %v1317 = vunpack.c.h.b16 %v120
  %v1318 = vunpack.c.l.b16 %v121
  %v1319 = vunpack.c.h.b16 %v121
  %v1320 = vunpack.c.l.b16 %v122
  %v1321 = vunpack.c.h.b16 %v122
  %v1322 = vunpack.c.l.b16 %v123
  %v1323 = vunpack.c.h.b16 %v123
  %v1324 = vunpack.c.l.b16 %v124
  %v1325 = vunpack.c.h.b16 %v124
  %v1326 = vunpack.c.l.b16 %v125
  %v1327 = vunpack.c.h.b16 %v125
  %v1328 = vunpack.c.l.b16 %v126
  %v1329 = vunpack.c.h.b16 %v126
  %v1330 = vunpack.c.l.b16 %v127
  %v1331 = vunpack.c.h.b16 %v127
  %v1332 = vunpack.c.l.b16 %v128
  %v1333 = vunpack.c.h.b16 %v128
  %v1334 = vunpack.c.l.b16 %v129
  %v1335 = vunpack.c.h.b16 %v129
  %v1336 = vunpack.c.l.b16 %v130
  %v1337 = vunpack.c.h.b16 %v130
  %v1338 = vunpack.c.l.b16 %v131
  %v1339 = vunpack.c.h.b16 %v131
  %v1340 = vunpack.c.l.b16 %v132
  %v1341 = vunpack.c.h.b16 %v132
  %v1342 = vunpack.c.l.b16 %v133
  %v1343 = vunpack.c.h.b16 %v133
  %v1344 = vunpack.c.l.b16 %v134
  %v1345 = vunpack.c.h.b16 %v134
  %v1346 = vunpack.c.l.b16 %v135
  %v1347 = vunpack.c.h.b16 %v135
  %v1348 = vunpack.c.l.b16 %v136
  %v1349 = vunpack.c.h.b16 %v136
  %v1350 = vunpack.c.l.b16 %v137
  %v1351 = vunpack.c.h.b16 %v137
  %v1352 = vunpack.c.l.b16 %v138
  %v1353 = vunpack.c.h.b16 %v138
  %v1354 = vunpack.c.l.b16 %v139
  %v1355 = vunpack.c.h.b16 %v139
  %v1356 = vunpack.c.l.b16 %v140
  %v1357 = vunpack.c.h.b16 %v140
  %v1358 = vunpack.c.l.b16 %v141
  %v1359 = vunpack.c.h.b16 %v141
  %v1360 = vunpack.c.l.b16 %v142
  %v1361 = vunpack.c.h.b16 %v142
  %v1362 = vunpack.c.l.b16 %v143
  %v1363 = vunpack.c.h.b16 %v143
  %v1364 = vunpack.c.l.b16 %v144
  %v1365 = vunpack.c.h.b16 %v144
  %v1366 = vunpack.c.l.b16 %v145
  %v1367 = vunpack.c.h.b16 %v145
  %v1368 = vunpack.c.l.b16 %v146
  %v1369 = vunpack.c.h.b16 %v146
  %v1370 = vunpack.c.l.b16 %v147
  %v1371 = vunpack.c.h.b16 %v147
  %v1372 = vunpack.c.l.b16 %v148
  %v1373 = vunpack.c.h.b16 %v148
  %v1374 = vunpack.c.l.b16 %v149
  %v1375 = vunpack.c.h.b16 %v149
  %v1376 = vunpack.c.l.b16 %v150
  %v1377 = vunpack.c.h.b16 %v150
  %v1378 = vunpack.c.l.b16 %v151
  %v1379 = vunpack.c.h.b16 %v151
  %v1380 = vunpack.c.l.b16 %v152
  %v1381 = vunpack.c.h.b16 %v152
  %v1382 = vunpack.c.l.b16 %v153
  %v1383 = vunpack.c.h.b16 %v153
  %v1384 = vunpack.c.l.b16 %v154
  %v1385 = vunpack.c.h.b16 %v154
  %v1386 = vunpack.c.l.b16 %v155
  %v1387 = vunpack.c.h.b16 %v155
  %v1388 = vunpack.c.l.b16 %v156
  %v1389 = vunpack.c.h.b16 %v156
  %v1390 = vunpack.c.l.b16 %v157
  %v1391 = vunpack.c.h.b16 %v157
  %v1392 = vunpack.c.l.b16 %v158
  %v1393 = vunpack.c.h.b16 %v158
  %v1394 = vunpack.c.l.b16 %v159
  %v1395 = vunpack.c.h.b16 %v159
  %v1396 = vunpack.c.l.b16 %v160
  %v1397 = vunpack.c.h.b16 %v160
  %v1398 = vunpack.c.l.b16 %v161
  %v1399 = vunpack.c.h.b16 %v161
  %v1400 = vunpack.c.l.b16 %v162
  %v1401 = vunpack.c.h.b16 %v162
  %v1402 = vunpack.c.l.b16 %v163
  %v1403 = vunpack.c.h.b16 %v163
  %v1404 = vunpack.c.l.b16 %v164
  %v1405 = vunpack.c.h.b16 %v164
  %v1406 = vunpack.c.l.b16 %v165
  %v1407 = vunpack.c.h.b16 %v165
  %v1408 = vunpack.c.l.b16 %v166
  %v1409 = vunpack.c.h.b16 %v166
  %v1410 = vunpack.c.l.b16 %v167
  %v1411 = vunpack.c.h.b16 %v167
  %v1412 = vunpack.c.l.b16 %v168
  %v1413 = vunpack.c.h.b16 %v168
  %v1414 = vunpack.c.l.b16 %v169
  %v1415 = vunpack.c.h.b16 %v169
  %v1416 = vunpack.c.l.b16 %v170
  %v1417 = vunpack.c.h.b16 %v170
  %v1418 = vunpack.c.l.b16 %v171
  %v1419 = vunpack.c.h.b16 %v171
  %v1420 = vunpack.c.l.b16 %v172
  %v1421 = vunpack.c.h.b16 %v172
  %v1422 = vunpack.c.l.b16 %v173
  %v1423 = vunpack.c.h.b16 %v173
  %v1424 = vunpack.c.l.b16 %v174
  %v1425 = vunpack.c.h.b16 %v174
  %v1426 = vunpack.c.l.b16 %v175
  %v1427 = vunpack.c.h.b16 %v175
  %v1428 = vunpack.c.l.b16 %v176
  %v1429 = vunpack.c.h.b16 %v176
  %v1430 = vunpack.c.l.b16 %v177
  %v1431 = vunpack.c.h.b16 %v177
  %v1432 = vunpack.c.l.b16 %v178
  %v1433 = vunpack.c.h.b16 %v178
  %v1434 = vunpack.c.l.b16 %v179
  %v1435 = vunpack.c.h.b16 %v179
  %v1436 = vunpack.c.l.b16 %v180
  %v1437 = vunpack.c.h.b16 %v180
  %v1438 = vunpack.c.l.b16 %v181
  %v1439 = vunpack.c.h.b16 %v181
  %v1440 = vunpack.c.l.b16 %v182
  %v1441 = vunpack.c.h.b16 %v182
  %v1442 = vunpack.c.l.b16 %v183
  %v1443 = vunpack.c.h.b16 %v183
  %v1444 = vunpack.c.l.b16 %v184
  %v1445 = vunpack.c.h.b16 %v184
  %v1446 = vunpack.c.l.b16 %v185
  %v1447 = vunpack.c.h.b16 %v185
  %v1448 = vunpack.c.l.b16 %v186
  %v1449 = vunpack.c.h.b16 %v186
  %v1450 = vunpack.c.l.b16 %v187
  %v1451 = vunpack.c.h.b16 %v187
  %v1452 = vunpack.c.l.b16 %v188
  %v1453 = vunpack.c.h.b16 %v188
  %v1454 = vunpack.c.l.b16 %v189
  %v1455 = vunpack.c.h.b16 %v189
  %v1456 = vunpack.c.l.b16 %v190
  %v1457 = vunpack.c.h.b16 %v190
  %v1458 = vunpack.c.l.b16 %v191
  %v1459 = vunpack.c.h.b16 %v191
  %v1460 = vunpack.c.l.b16 %v192
  %v1461 = vunpack.c.h.b16 %v192
  %v1462 = vunpack.c.l.b16 %v193
  %v1463 = vunpack.c.h.b16 %v193
  %v1464 = vunpack.c.l.b16 %v194
  %v1465 = vunpack.c.h.b16 %v194
  %v1466 = vunpack.c.l.b16 %v195
  %v1467 = vunpack.c.h.b16 %v195
  %v1468 = vunpack.c.l.b16 %v196
  %v1469 = vunpack.c.h.b16 %v196
  %v1470 = vunpack.c.l.b16 %v197
  %v1471 = vunpack.c.h.b16 %v197
  %v1472 = vunpack.c.l.b16 %v198
  %v1473 = vunpack.c.h.b16 %v198
  %v1474 = vunpack.c.l.b16 %v199
  %v1475 = vunpack.c.h.b16 %v199
  %v1476 = vunpack.c.l.b16 %v200
  %v1477 = vunpack.c.h.b16 %v200
  %v1478 = vunpack.c.l.b16 %v201
  %v1479 = vunpack.c.h.b16 %v201
  %v1480 = vunpack.c.l.b16 %v202
  %v1481 = vunpack.c.h.b16 %v202
  %v1482 = vunpack.c.l.b16 %v203
  %v1483 = vunpack.c.h.b16 %v203
  %v1484 = vunpack.c.l.b16 %v204
  %v1485 = vunpack.c.h.b16 %v204
  %v1486 = vunpack.c.l.b16 %v205
  %v1487 = vunpack.c.h.b16 %v205
  %v1488 = vunpack.c.l.b16 %v206
  %v1489 = vunpack.c.h.b16 %v206
  %v1490 = vunpack.c.l.b16 %v207
  %v1491 = vunpack.c.h.b16 %v207
  %v1492 = vunpack.c.l.b16 %v208
  %v1493 = vunpack.c.h.b16 %v208
  %v1494 = vunpack.c.l.b16 %v209
  %v1495 = vunpack.c.h.b16 %v209
  %v1496 = vunpack.c.l.b16 %v210
  %v1497 = vunpack.c.h.b16 %v210
  %v1498 = vunpack.c.l.b16 %v211
  %v1499 = vunpack.c.h.b16 %v211
  %v1500 = vunpack.c.l.b16 %v212
  %v1501 = vunpack.c.h.b16 %v212
  %v1502 = vunpack.c.l.b16 %v213
  %v1503 = vunpack.c.h.b16 %v213
  %v1504 = vunpack.c.l.b16 %v214
  %v1505 = vunpack.c.h.b16 %v214
  %v1506 = vunpack.c.l.b16 %v215
  %v1507 = vunpack.c.h.b16 %v215
  %v1508 = vunpack.c.l.b16 %v216
  %v1509 = vunpack.c.h.b16 %v216
  %v1510 = vunpack.c.l.b16 %v217
  %v1511 = vunpack.c.h.b16 %v217
  %v1512 = vunpack.c.l.b16 %v218
  %v1513 = vunpack.c.h.b16 %v218
  %v1514 = vunpack.c.l.b16 %v219
  %v1515 = vunpack.c.h.b16 %v219
  %v1516 = vunpack.c.l.b16 %v220
  %v1517 = vunpack.c.h.b16 %v220
  %v1518 = vunpack.c.l.b16 %v221
  %v1519 = vunpack.c.h.b16 %v221
  %v1520 = vunpack.c.l.b16 %v222
  %v1521 = vunpack.c.h.b16 %v222
  %v1522 = vunpack.c.l.b16 %v223
  %v1523 = vunpack.c.h.b16 %v223
  %v1524 = vunpack.c.l.b16 %v224
  %v1525 = vunpack.c.h.b16 %v224
  %v1526 = vunpack.c.l.b16 %v225
  %v1527 = vunpack.c.h.b16 %v225
  %v1528 = vunpack.c.l.b16 %v226
  %v1529 = vunpack.c.h.b16 %v226
  %v1530 = vunpack.c.l.b16 %v227
  %v1531 = vunpack.c.h.b16 %v227
  %v1532 = vunpack.c.l.b16 %v228
  %v1533 = vunpack.c.h.b16 %v228
  %v1534 = vunpack.c.l.b16 %v229
  %v1535 = vunpack.c.h.b16 %v229
  %v1536 = vunpack.c.l.b16 %v230
  %v1537 = vunpack.c.h.b16 %v230
  %v1538 = vunpack.c.l.b16 %v231
  %v1539 = vunpack.c.h.b16 %v231
  %v1540 = vunpack.c.l.b16 %v232
  %v1541 = vunpack.c.h.b16 %v232
  %v1542 = vunpack.c.l.b16 %v233
  %v1543 = vunpack.c.h.b16 %v233
  %v1544 = vunpack.c.l.b16 %v234
  %v1545 = vunpack.c.h.b16 %v234
  %v1546 = vunpack.c.l.b16 %v235
  %v1547 = vunpack.c.h.b16 %v235
  %v1548 = vunpack.c.l.b16 %v236
  %v1549 = vunpack.c.h.b16 %v236
  %v1550 = vunpack.c.l.b16 %v237
  %v1551 = vunpack.c.h.b16 %v237
  %v1552 = vunpack.c.l.b16 %v238
  %v1553 = vunpack.c.h.b16 %v238
  %v1554 = vunpack.c.l.b16 %v239
  %v1555 = vunpack.c.h.b16 %v239
  %v1556 = vunpack.c.l.b16 %v240
  %v1557 = vunpack.c.h.b16 %v240
  %v1558 = vunpack.c.l.b16 %v241
  %v1559 = vunpack.c.h.b16 %v241
  %v1560 = vunpack.c.l.b16 %v242
  %v1561 = vunpack.c.h.b16 %v242
  %v1562 = vunpack.c.l.b16 %v243
  %v1563 = vunpack.c.h.b16 %v243
  %v1564 = vunpack.c.l.b16 %v244
  %v1565 = vunpack.c.h.b16 %v244
  %v1566 = vunpack.c.l.b16 %v245
  %v1567 = vunpack.c.h.b16 %v245
  %v1568 = vunpack.c.l.b16 %v246
  %v1569 = vunpack.c.h.b16 %v246
  %v1570 = vunpack.c.l.b16 %v247
  %v1571 = vunpack.c.h.b16 %v247
  %v1572 = vunpack.c.l.b16 %v248
  %v1573 = vunpack.c.h.b16 %v248
  %v1574 = vunpack.c.l.b16 %v249
  %v1575 = vunpack.c.h.b16 %v249
  %v1576 = vunpack.c.l.b16 %v250
  %v1577 = vunpack.c.h.b16 %v250
  %v1578 = vunpack.c.l.b16 %v251
  %v1579 = vunpack.c.h.b16 %v251
  %v1580 = vunpack.c.l.b16 %v252
  %v1581 = vunpack.c.h.b16 %v252
  %v1582 = vunpack.c.l.b16 %v253
  %v1583 = vunpack.c.h.b16 %v253
  %v1584 = vunpack.c.l.b16 %v254
  %v1585 = vunpack.c.h.b16 %v254
  %v1586 = vunpack.c.l.b16 %v255
  %v1587 = vunpack.c.h.b16 %v255
  %v1588 = vunpack.c.l.b16 %v256
  %v1589 = vunpack.c.h.b16 %v256
  %v1590 = vunpack.c.l.b16 %v257
  %v1591 = vunpack.c.h.b16 %v257
  %v1592 = vunpack.c.l.b16 %v258
  %v1593 = vunpack.c.h.b16 %v258
  %v1594 = vunpack.c.l.b16 %v259
  %v1595 = vunpack.c.h.b16 %v259
  %v1596 = vunpack.c.l.b16 %v260
  %v1597 = vunpack.c.h.b16 %v260
  %v1598 = vunpack.c.l.b16 %v261
  %v1599 = vunpack.c.h.b16 %v261
  %v1600 = vunpack.c.l.b16 %v262
  %v1601 = vunpack.c.h.b16 %v262
  %v1602 = vunpack.c.l.b16 %v263
  %v1603 = vunpack.c.h.b16 %v263
  %v1604 = vunpack.c.l.b16 %v264
  %v1605 = vunpack.c.h.b16 %v264
  %v1606 = vunpack.c.l.b16 %v265
  %v1607 = vunpack.c.h.b16 %v265
  %v1608 = vunpack.c.l.b16 %v266
  %v1609 = vunpack.c.h.b16 %v266
  %v1610 = vunpack.c.l.b16 %v267
  %v1611 = vunpack.c.h.b16 %v267
  %v1612 = vunpack.c.l.b16 %v268
  %v1613 = vunpack.c.h.b16 %v268
  %v1614 = vunpack.c.l.b16 %v269
  %v1615 = vunpack.c.h.b16 %v269
  %v1616 = vunpack.c.l.b16 %v270
  %v1617 = vunpack.c.h.b16 %v270
  %v1618 = vunpack.c.l.b16 %v271
  %v1619 = vunpack.c.h.b16 %v271
  %v1620 = vunpack.c.l.b16 %v272
  %v1621 = vunpack.c.h.b16 %v272
  %v1622 = vunpack.c.l.b16 %v273
  %v1623 = vunpack.c.h.b16 %v273
  %v1624 = vunpack.c.l.b16 %v274
  %v1625 = vunpack.c.h.b16 %v274
  %v1626 = vunpack.c.l.b16 %v275
  %v1627 = vunpack.c.h.b16 %v275
  %v1628 = vunpack.c.l.b16 %v276
  %v1629 = vunpack.c.h.b16 %v276
  %v1630 = vunpack.c.l.b16 %v277
  %v1631 = vunpack.c.h.b16 %v277
  %v1632 = vunpack.c.l.b16 %v278
  %v1633 = vunpack.c.h.b16 %v278
  %v1634 = vunpack.c.l.b16 %v279
  %v1635 = vunpack.c.h.b16 %v279
  %v1636 = vunpack.c.l.b16 %v280
  %v1637 = vunpack.c.h.b16 %v280
  %v1638 = vunpack.c.l.b16 %v281
  %v1639 = vunpack.c.h.b16 %v281
  %v1640 = vunpack.c.l.b16 %v282
  %v1641 = vunpack.c.h.b16 %v282
  %v1642 = vunpack.c.l.b16 %v283
  %v1643 = vunpack.c.h.b16 %v283
  %v1644 = vunpack.c.l.b16 %v284
  %v1645 = vunpack.c.h.b16 %v284
  %v1646 = vunpack.c.l.b16 %v285
  %v1647 = vunpack.c.h.b16 %v285
  %v1648 = vunpack.c.l.b16 %v286
  %v1649 = vunpack.c.h.b16 %v286
  %v1650 = vunpack.c.l.b16 %v287
  %v1651 = vunpack.c.h.b16 %v287
  %v1652 = vunpack.c.l.b16 %v288
  %v1653 = vunpack.c.h.b16 %v288
  %v1654 = vunpack.c.l.b16 %v289
  %v1655 = vunpack.c.h.b16 %v289
  %v1656 = vunpack.c.l.b16 %v290
  %v1657 = vunpack.c.h.b16 %v290
  %v1658 = vunpack.c.l.b16 %v291
  %v1659 = vunpack.c.h.b16 %v291
  %v1660 = vunpack.c.l.b16 %v292
  %v1661 = vunpack.c.h.b16 %v292
  %v1662 = vunpack.c.l.b16 %v293
  %v1663 = vunpack.c.h.b16 %v293
  %v1664 = vunpack.c.l.b16 %v294
  %v1665 = vunpack.c.h.b16 %v294
  %v1666 = vunpack.c.l.b16 %v295
  %v1667 = vunpack.c.h.b16 %v295
  %v1668 = vunpack.c.l.b16 %v296
  %v1669 = vunpack.c.h.b16 %v296
  %v1670 = vunpack.c.l.b16 %v297
  %v1671 = vunpack.c.h.b16 %v297
  %v1672 = vunpack.c.l.b16 %v298
  %v1673 = vunpack.c.h.b16 %v298
  %v1674 = vunpack.c.l.b16 %v299
  %v1675 = vunpack.c.h.b16 %v299
  %v1676 = vunpack.c.l.b16 %v300
  %v1677 = vunpack.c.h.b16 %v300
  %v1678 = vunpack.c.l.b16 %v301
  %v1679 = vunpack.c.h.b16 %v301
  %v1680 = vunpack.c.l.b16 %v302
  %v1681 = vunpack.c.h.b16 %v302
  %v1682 = vunpack.c.l.b16 %v303
  %v1683 = vunpack.c.h.b16 %v303
  %v1684 = vunpack.c.l.b16 %v304
  %v1685 = vunpack.c.h.b16 %v304
  %v1686 = vunpack.c.l.b16 %v305
  %v1687 = vunpack.c.h.b16 %v305
  %v1688 = vunpack.c.l.b16 %v306
  %v1689 = vunpack.c.h.b16 %v306
  %v1690 = vunpack.c.l.b16 %v307
  %v1691 = vunpack.c.h.b16 %v307
  %v1692 = vunpack.c.l.b16 %v308
  %v1693 = vunpack.c.h.b16 %v308
  %v1694 = vunpack.c.l.b16 %v309
  %v1695 = vunpack.c.h.b16 %v309
  %v1696 = vunpack.c.l.b16 %v310
  %v1697 = vunpack.c.h.b16 %v310
  %v1698 = vunpack.c.l.b16 %v311
  %v1699 = vunpack.c.h.b16 %v311
  %v1700 = vunpack.c.l.b16 %v312
  %v1701 = vunpack.c.h.b16 %v312
  %v1702 = vunpack.c.l.b16 %v313
  %v1703 = vunpack.c.h.b16 %v313
  %v1704 = vunpack.c.l.b16 %v314
  %v1705 = vunpack.c.h.b16 %v314
  %v1706 = vunpack.c.l.b16 %v315
  %v1707 = vunpack.c.h.b16 %v315
  %v1708 = vunpack.c.l.b16 %v316
  %v1709 = vunpack.c.h.b16 %v316
  %v1710 = vunpack.c.l.b16 %v317
  %v1711 = vunpack.c.h.b16 %v317
  %v1712 = vunpack.c.l.b16 %v318
  %v1713 = vunpack.c.h.b16 %v318
  %v1714 = vunpack.c.l.b16 %v319
  %v1715 = vunpack.c.h.b16 %v319
  %v1716 = vunpack.c.l.b16 %v320
  %v1717 = vunpack.c.h.b16 %v320
  %v1718 = vunpack.c.l.b16 %v321
  %v1719 = vunpack.c.h.b16 %v321
  %v1720 = vunpack.c.l.b16 %v322
  %v1721 = vunpack.c.h.b16 %v322
  %v1722 = vunpack.c.l.b16 %v323
  %v1723 = vunpack.c.h.b16 %v323
  %v1724 = vunpack.c.l.b16 %v324
  %v1725 = vunpack.c.h.b16 %v324
  %v1726 = vunpack.c.l.b16 %v325
  %v1727 = vunpack.c.h.b16 %v325
  %v1728 = vunpack.c.l.b16 %v326
  %v1729 = vunpack.c.h.b16 %v326
  %v1730 = vunpack.c.l.b16 %v327
  %v1731 = vunpack.c.h.b16 %v327
  %v1732 = vunpack.c.l.b16 %v328
  %v1733 = vunpack.c.h.b16 %v328
  %v1734 = vunpack.c.l.b16 %v329
  %v1735 = vunpack.c.h.b16 %v329
  %v1736 = vunpack.c.l.b16 %v330
  %v1737 = vunpack.c.h.b16 %v330
  %v1738 = vunpack.c.l.b16 %v331
  %v1739 = vunpack.c.h.b16 %v331
  %v1740 = vunpack.c.l.b16 %v332
  %v1741 = vunpack.c.h.b16 %v332
  %v1742 = vunpack.c.l.b16 %v333
  %v1743 = vunpack.c.h.b16 %v333
  %v1744 = vunpack.c.l.b16 %v334
  %v1745 = vunpack.c.h.b16 %v334
  %v1746 = vunpack.c.l.b16 %v335
  %v1747 = vunpack.c.h.b16 %v335
  %v1748 = vunpack.c.l.b16 %v336
  %v1749 = vunpack.c.h.b16 %v336
  %v1750 = vunpack.c.l.b16 %v337
  %v1751 = vunpack.c.h.b16 %v337
  %v1752 = vunpack.c.l.b16 %v338
  %v1753 = vunpack.c.h.b16 %v338
  %v1754 = vunpack.c.l.b16 %v339
  %v1755 = vunpack.c.h.b16 %v339
  %v1756 = vunpack.c.l.b16 %v340
  %v1757 = vunpack.c.h.b16 %v340
  %v1758 = vunpack.c.l.b16 %v341
  %v1759 = vunpack.c.h.b16 %v341
  %v1760 = vunpack.c.l.b16 %v342
  %v1761 = vunpack.c.h.b16 %v342
  %v1762 = vunpack.c.l.b16 %v343
  %v1763 = vunpack.c.h.b16 %v343
  %v1764 = vunpack.c.l.b16 %v344
  %v1765 = vunpack.c.h.b16 %v344
  %v1766 = vunpack.c.l.b16 %v345
  %v1767 = vunpack.c.h.b16 %v345
  %v1768 = vunpack.c.l.b16 %v346
  %v1769 = vunpack.c.h.b16 %v346
  %v1770 = vunpack.c.l.b16 %v347
  %v1771 = vunpack.c.h.b16 %v347
  %v1772 = vunpack.c.l.b16 %v348
  %v1773 = vunpack.c.h.b16 %v348
  %v1774 = vunpack.c.l.b16 %v349
  %v1775 = vunpack.c.h.b16 %v349
  %v1776 = vunpack.c.l.b16 %v350
  %v1777 = vunpack.c.h.b16 %v350
  %v1778 = vunpack.c.l.b16 %v351
  %v1779 = vunpack.c.h.b16 %v351
  %v1780 = vunpack.c.l.b16 %v352
  %v1781 = vunpack.c.h.b16 %v352
  %v1782 = vunpack.c.l.b16 %v353
  %v1783 = vunpack.c.h.b16 %v353
  %v1784 = vunpack.c.l.b16 %v354
  %v1785 = vunpack.c.h.b16 %v354
  %v1786 = vunpack.c.l.b16 %v355
  %v1787 = vunpack.c.h.b16 %v355
  %v1788 = vunpack.c.l.b16 %v356
  %v1789 = vunpack.c.h.b16 %v356
  %v1790 = vunpack.c.l.b16 %v357
  %v1791 = vunpack.c.h.b16 %v357
  %v1792 = vunpack.c.l.b16 %v358
  %v1793 = vunpack.c.h.b16 %v358
  %v1794 = vunpack.c.l.b16 %v359
  %v1795 = vunpack.c.h.b16 %v359
  %v1796 = vunpack.c.l.b16 %v360
  %v1797 = vunpack.c.h.b16 %v360
  %v1798 = vunpack.c.l.b16 %v361
  %v1799 = vunpack.c.h.b16 %v361
  %v1800 = vunpack.c.l.b16 %v362
  %v1801 = vunpack.c.h.b16 %v362
  %v1802 = vunpack.c.l.b16 %v363
  %v1803 = vunpack.c.h.b16 %v363
  %v1804 = vunpack.c.l.b16 %v364
  %v1805 = vunpack.c.h.b16 %v364
  %v1806 = vunpack.c.l.b16 %v365
  %v1807 = vunpack.c.h.b16 %v365
  %v1808 = vunpack.c.l.b16 %v366
  %v1809 = vunpack.c.h.b16 %v366
  %v1810 = vunpack.c.l.b16 %v367
  %v1811 = vunpack.c.h.b16 %v367
  %v1812 = vunpack.c.l.b16 %v368
  %v1813 = vunpack.c.h.b16 %v368
  %v1814 = vunpack.c.l.b16 %v369
  %v1815 = vunpack.c.h.b16 %v369
  %v1816 = vunpack.c.l.b16 %v370
  %v1817 = vunpack.c.h.b16 %v370
  %v1818 = vunpack.c.l.b16 %v371
  %v1819 = vunpack.c.h.b16 %v371
  %v1820 = vunpack.c.l.b16 %v372
  %v1821 = vunpack.c.h.b16 %v372
  %v1822 = vunpack.c.l.b16 %v373
  %v1823 = vunpack.c.h.b16 %v373
  %v1824 = vunpack.c.l.b16 %v374
  %v1825 = vunpack.c.h.b16 %v374
  %v1826 = vunpack.c.l.b16 %v375
  %v1827 = vunpack.c.h.b16 %v375
  %v1828 = vunpack.c.l.b16 %v376
  %v1829 = vunpack.c.h.b16 %v376
  %v1830 = vunpack.c.l.b16 %v377
  %v1831 = vunpack.c.h.b16 %v377
  %v1832 = vunpack.c.l.b16 %v378
  %v1833 = vunpack.c.h.b16 %v378
  %v1834 = vunpack.c.l.b16 %v379
  %v1835 = vunpack.c.h.b16 %v379
  %v1836 = vunpack.c.l.b16 %v380
  %v1837 = vunpack.c.h.b16 %v380
  %v1838 = vunpack.c.l.b16 %v381
  %v1839 = vunpack.c.h.b16 %v381
  %v1840 = vunpack.c.l.b16 %v382
  %v1841 = vunpack.c.h.b16 %v382
  %v1842 = vunpack.c.l.b16 %v383
  %v1843 = vunpack.c.h.b16 %v383
  %v1844 = vunpack.c.l.b16 %v384
  %v1845 = vunpack.c.h.b16 %v384
  %v1846 = vunpack.c.l.b16 %v385
  %v1847 = vunpack.c.h.b16 %v385
  %v1848 = vunpack.c.l.b16 %v386
  %v1849 = vunpack.c.h.b16 %v386
  %v1850 = vunpack.c.l.b16 %v387
  %v1851 = vunpack.c.h.b16 %v387
  %v1852 = vunpack.c.l.b16 %v388
  %v1853 = vunpack.c.h.b16 %v388
  %v1854 = vunpack.c.l.b16 %v389
  %v1855 = vunpack.c.h.b16 %v389
  %v1856 = vunpack.c.l.b16 %v390
  %v1857 = vunpack.c.h.b16 %v390
  %v1858 = vunpack.c.l.b16 %v391
  %v1859 = vunpack.c.h.b16 %v391
  %v1860 = vunpack.c.l.b16 %v392
  %v1861 = vunpack.c.h.b16 %v392
  %v1862 = vunpack.c.l.b16 %v393
  %v1863 = vunpack.c.h.b16 %v393
  %v1864 = vunpack.c.l.b16 %v394
  %v1865 = vunpack.c.h.b16 %v394
  %v1866 = vunpack.c.l.b16 %v395
  %v1867 = vunpack.c.h.b16 %v395
  %v1868 = vunpack.c.l.b16 %v396
  %v1869 = vunpack.c.h.b16 %v396
  %v1870 = vunpack.c.l.b16 %v397
  %v1871 = vunpack.c.h.b16 %v397
  %v1872 = vunpack.c.l.b16 %v398
  %v1873 = vunpack.c.h.b16 %v398
  %v1874 = vunpack.c.l.b16 %v399
  %v1875 = vunpack.c.h.b16 %v399
  %v1876 = vunpack.c.l.b16 %v400
  %v1877 = vunpack.c.h.b16 %v400
  %v1878 = vunpack.c.l.b16 %v401
  %v1879 = vunpack.c.h.b16 %v401
  %v1880 = vunpack.c.l.b16 %v402
  %v1881 = vunpack.c.h.b16 %v402
  %v1882 = vunpack.c.l.b16 %v403
  %v1883 = vunpack.c.h.b16 %v403
  %v1884 = vunpack.c.l.b16 %v404
  %v1885 = vunpack.c.h.b16 %v404
  %v1886 = vunpack.c.l.b16 %v405
  %v1887 = vunpack.c.h.b16 %v405
  %v1888 = vunpack.c.l.b16 %v406
  %v1889 = vunpack.c.h.b16 %v406
  %v1890 = vunpack.c.l.b16 %v407
  %v1891 = vunpack.c.h.b16 %v407
  %v1892 = vunpack.c.l.b16 %v408
  %v1893 = vunpack.c.h.b16 %v408
  %v1894 = vunpack.c.l.b16 %v409
  %v1895 = vunpack.c.h.b16 %v409
  %v1896 = vunpack.c.l.b16 %v410
  %v1897 = vunpack.c.h.b16 %v410
  %v1898 = vunpack.c.l.b16 %v411
  %v1899 = vunpack.c.h.b16 %v411
  %v1900 = vunpack.c.l.b16 %v412
  %v1901 = vunpack.c.h.b16 %v412
  %v1902 = vunpack.c.l.b16 %v413
  %v1903 = vunpack.c.h.b16 %v413
  %v1904 = vunpack.c.l.b16 %v414
  %v1905 = vunpack.c.h.b16 %v414
  %v1906 = vunpack.c.l.b16 %v415
  %v1907 = vunpack.c.h.b16 %v415
  %v1908 = vunpack.c.l.b16 %v416
  %v1909 = vunpack.c.h.b16 %v416
  %v1910 = vunpack.c.l.b16 %v417
  %v1911 = vunpack.c.h.b16 %v417
  %v1912 = vunpack.c.l.b16 %v418
  %v1913 = vunpack.c.h.b16 %v418
  %v1914 = vunpack.c.l.b16 %v419
  %v1915 = vunpack.c.h.b16 %v419
  %v1916 = vunpack.c.l.b16 %v420
  %v1917 = vunpack.c.h.b16 %v420
  %v1918 = vunpack.c.l.b16 %v421
  %v1919 = vunpack.c.h.b16 %v421
  %v1920 = vunpack.c.l.b16 %v422
  %v1921 = vunpack.c.h.b16 %v422
  %v1922 = vunpack.c.l.b16 %v423
  %v1923 = vunpack.c.h.b16 %v423
  %v1924 = vunpack.c.l.b16 %v424
  %v1925 = vunpack.c.h.b16 %v424
  %v1926 = vunpack.c.l.b16 %v425
  %v1927 = vunpack.c.h.b16 %v425
  %v1928 = vunpack.c.l.b16 %v426
  %v1929 = vunpack.c.h.b16 %v426
  %v1930 = vunpack.c.l.b16 %v427
  %v1931 = vunpack.c.h.b16 %v427
  %v1932 = vunpack.c.l.b16 %v428
  %v1933 = vunpack.c.h.b16 %v428
  %v1934 = vunpack.c.l.b16 %v429
  %v1935 = vunpack.c.h.b16 %v429
  %v1936 = vunpack.c.l.b16 %v430
  %v1937 = vunpack.c.h.b16 %v430
  %v1938 = vunpack.c.l.b16 %v431
  %v1939 = vunpack.c.h.b16 %v431
  %v1940 = vunpack.c.l.b16 %v432
  %v1941 = vunpack.c.h.b16 %v432
  %v1942 = vunpack.c.l.b16 %v433
  %v1943 = vunpack.c.h.b16 %v433
  %v1944 = vunpack.c.l.b16 %v434
  %v1945 = vunpack.c.h.b16 %v434
  %v1946 = vunpack.c.l.b16 %v435
  %v1947 = vunpack.c.h.b16 %v435
  %v1948 = vunpack.c.l.b16 %v436
  %v1949 = vunpack.c.h.b16 %v436
  %v1950 = vunpack.c.l.b16 %v437
  %v1951 = vunpack.c.h.b16 %v437
  %v1952 = vunpack.c.l.b16 %v438
  %v1953 = vunpack.c.h.b16 %v438
  %v1954 = vunpack.c.l.b16 %v439
  %v1955 = vunpack.c.h.b16 %v439
  %v1956 = vunpack.c.l.b16 %v440
  %v1957 = vunpack.c.h.b16 %v440
  %v1958 = vunpack.c.l.b16 %v441
  %v1959 = vunpack.c.h.b16 %v441
  %v1960 = vunpack.c.l.b16 %v442
  %v1961 = vunpack.c.h.b16 %v442
  %v1962 = vunpack.c.l.b16 %v443
  %v1963 = vunpack.c.h.b16 %v443
  %v1964 = vunpack.c.l.b16 %v444
  %v1965 = vunpack.c.h.b16 %v444
  %v1966 = vunpack.c.l.b16 %v445
  %v1967 = vunpack.c.h.b16 %v445
  %v1968 = vunpack.c.l.b16 %v446
  %v1969 = vunpack.c.h.b16 %v446
  %v1970 = vunpack.c.l.b16 %v447
  %v1971 = vunpack.c.h.b16 %v447
  %v1972 = vunpack.c.l.b16 %v448
  %v1973 = vunpack.c.h.b16 %v448
  %v1974 = vunpack.c.l.b16 %v449
  %v1975 = vunpack.c.h.b16 %v449
  %v1976 = vunpack.c.l.b16 %v450
  %v1977 = vunpack.c.h.b16 %v450
  %v1978 = vunpack.c.l.b16 %v451
  %v1979 = vunpack.c.h.b16 %v451
  %v1980 = vunpack.c.l.b16 %v452
  %v1981 = vunpack.c.h.b16 %v452
  %v1982 = vunpack.c.l.b16 %v453
  %v1983 = vunpack.c.h.b16 %v453
  %v1984 = vunpack.c.l.b16 %v454
  %v1985 = vunpack.c.h.b16 %v454
  %v1986 = vunpack.c.l.b16 %v455
  %v1987 = vunpack.c.h.b16 %v455
  %v1988 = vunpack.c.l.b16 %v456
  %v1989 = vunpack.c.h.b16 %v456
  %v1990 = vunpack.c.l.b16 %v457
  %v1991 = vunpack.c.h.b16 %v457
  %v1992 = vunpack.c.l.b16 %v458
  %v1993 = vunpack.c.h.b16 %v458
  %v1994 = vunpack.c.l.b16 %v459
  %v1995 = vunpack.c.h.b16 %v459
  %v1996 = vunpack.c.l.b16 %v460
  %v1997 = vunpack.c.h.b16 %v460
  %v1998 = vunpack.c.l.b16 %v461
  %v1999 = vunpack.c.h.b16 %v461
  %v2000 = vunpack.c.l.b16 %v462
  %v2001 = vunpack.c.h.b16 %v462
  %v2002 = vunpack.c.l.b16 %v463
  %v2003 = vunpack.c.h.b16 %v463
  %v2004 = vunpack.c.l.b16 %v464
  %v2005 = vunpack.c.h.b16 %v464
  %v2006 = vunpack.c.l.b16 %v465
  %v2007 = vunpack.c.h.b16 %v465
  %v2008 = vunpack.c.l.b16 %v466
  %v2009 = vunpack.c.h.b16 %v466
  %v2010 = vunpack.c.l.b16 %v467
  %v2011 = vunpack.c.h.b16 %v467
  %v2012 = vunpack.c.l.b16 %v468
  %v2013 = vunpack.c.h.b16 %v468
  %v2014 = vunpack.c.l.b16 %v469
  %v2015 = vunpack.c.h.b16 %v469
  %v2016 = vunpack.c.l.b16 %v470
  %v2017 = vunpack.c.h.b16 %v470
  %v2018 = vunpack.c.l.b16 %v471
  %v2019 = vunpack.c.h.b16 %v471
  %v2020 = vunpack.c.l.b16 %v472
  %v2021 = vunpack.c.h.b16 %v472
  %v2022 = vunpack.c.l.b16 %v473
  %v2023 = vunpack.c.h.b16 %v473
  %v2024 = vunpack.c.l.b16 %v474
  %v2025 = vunpack.c.h.b16 %v474
  %v2026 = vunpack.c.l.b16 %v475
  %v2027 = vunpack.c.h.b16 %v475
  %v2028 = vunpack.c.l.b16 %v476
  %v2029 = vunpack.c.h.b16 %v476
  %v2030 = vunpack.c.l.b16 %v477
  %v2031 = vunpack.c.h.b16 %v477
  %v2032 = vunpack.c.l.b16 %v478
  %v2033 = vunpack.c.h.b16 %v478
  %v2034 = vunpack.c.l.b16 %v479
  %v2035 = vunpack.c.h.b16 %v479
  %v2036 = vunpack.c.l.b16 %v480
  %v2037 = vunpack.c.h.b16 %v480
  %v2038 = vunpack.c.l.b16 %v481
  %v2039 = vunpack.c.h.b16 %v481
  %v2040 = vunpack.c.l.b16 %v482
  %v2041 = vunpack.c.h.b16 %v482
  %v2042 = vunpack.c.l.b16 %v483
  %v2043 = vunpack.c.h.b16 %v483
  %v2044 = vunpack.c.l.b16 %v484
  %v2045 = vunpack.c.h.b16 %v484
  %v2046 = vunpack.c.l.b16 %v485
  %v2047 = vunpack.c.h.b16 %v485
  %v2048 = vunpack.c.l.b16 %v486
  %v2049 = vunpack.c.h.b16 %v486
  %v2050 = vunpack.c.l.b16 %v487
  %v2051 = vunpack.c.h.b16 %v487
  %v2052 = vunpack.c.l.b16 %v488
  %v2053 = vunpack.c.h.b16 %v488
  %v2054 = vunpack.c.l.b16 %v489
  %v2055 = vunpack.c.h.b16 %v489
  %v2056 = vunpack.c.l.b16 %v490
  %v2057 = vunpack.c.h.b16 %v490
  %v2058 = vunpack.c.l.b16 %v491
  %v2059 = vunpack.c.h.b16 %v491
  %v2060 = vunpack.c.l.b16 %v492
  %v2061 = vunpack.c.h.b16 %v492
  %v2062 = vunpack.c.l.b16 %v493
  %v2063 = vunpack.c.h.b16 %v493
  %v2064 = vunpack.c.l.b16 %v494
  %v2065 = vunpack.c.h.b16 %v494
  %v2066 = vunpack.c.l.b16 %v495
  %v2067 = vunpack.c.h.b16 %v495
  %v2068 = vunpack.c.l.b16 %v496
  %v2069 = vunpack.c.h.b16 %v496
  %v2070 = vunpack.c.l.b16 %v497
  %v2071 = vunpack.c.h.b16 %v497
  %v2072 = vunpack.c.l.b16 %v498
  %v2073 = vunpack.c.h.b16 %v498
  %v2074 = vunpack.c.l.b16 %v499
  %v2075 = vunpack.c.h.b16 %v499
  %v2076 = vunpack.c.l.b16 %v500
  %v2077 = vunpack.c.h.b16 %v500
  %v2078 = vunpack.c.l.b16 %v501
  %v2079 = vunpack.c.h.b16 %v501
  %v2080 = vunpack.c.l.b16 %v502
  %v2081 = vunpack.c.h.b16 %v502
  %v2082 = vunpack.c.l.b16 %v503
  %v2083 = vunpack.c.h.b16 %v503
  %v2084 = vunpack.c.l.b16 %v504
  %v2085 = vunpack.c.h.b16 %v504
  %v2086 = vunpack.c.l.b16 %v505
  %v2087 = vunpack.c.h.b16 %v505
  %v2088 = vunpack.c.l.b16 %v506
  %v2089 = vunpack.c.h.b16 %v506
  %v2090 = vunpack.c.l.b16 %v507
  %v2091 = vunpack.c.h.b16 %v507
  %v2092 = vunpack.c.l.b16 %v508
  %v2093 = vunpack.c.h.b16 %v508
  %v2094 = vunpack.c.l.b16 %v509
  %v2095 = vunpack.c.h.b16 %v509
  %v2096 = vunpack.c.l.b16 %v510
  %v2097 = vunpack.c.h.b16 %v510
  %v2098 = vunpack.c.l.b16 %v511
  %v2099 = vunpack.c.h.b16 %v511
  %v2100 = vunpack.c.l.b16 %v512
  %v2101 = vunpack.c.h.b16 %v512
  %v2102 = vunpack.c.l.b16 %v513
  %v2103 = vunpack.c.h.b16 %v513
  %v2104 = vunpack.c.l.b16 %v514
  %v2105 = vunpack.c.h.b16 %v514
  %v2106 = vunpack.c.l.b16 %v515
  %v2107 = vunpack.c.h.b16 %v515
  %v2108 = vunpack.c.l.b16 %v516
  %v2109 = vunpack.c.h.b16 %v516
  %v2110 = vunpack.c.l.b16 %v517
  %v2111 = vunpack.c.h.b16 %v517
  %v2112 = vunpack.c.l.b16 %v518
  %v2113 = vunpack.c.h.b16 %v518
  %v2114 = vunpack.c.l.b16 %v519
  %v2115 = vunpack.c.h.b16 %v519
  %v2116 = vunpack.c.l.b16 %v520
  %v2117 = vunpack.c.h.b16 %v520
  %v2118 = vunpack.c.l.b16 %v521
  %v2119 = vunpack.c.h.b16 %v521
  %v2120 = vunpack.c.l.b16 %v522
  %v2121 = vunpack.c.h.b16 %v522
  %v2122 = vunpack.c.l.b16 %v523
  %v2123 = vunpack.c.h.b16 %v523
  %v2124 = vunpack.c.l.b16 %v524
  %v2125 = vunpack.c.h.b16 %v524
  %v2126 = vunpack.c.l.b16 %v525
  %v2127 = vunpack.c.h.b16 %v525
  %v2128 = vunpack.c.l.b16 %v526
  %v2129 = vunpack.c.h.b16 %v526
  %v2130 = vunpack.c.l.b16 %v527
  %v2131 = vunpack.c.h.b16 %v527
  %v2132 = vunpack.c.l.b16 %v528
  %v2133 = vunpack.c.h.b16 %v528
  %v2134 = vunpack.c.l.b16 %v529
  %v2135 = vunpack.c.h.b16 %v529
  %v2136 = vpack.c.b16 %v1120, %v1112
  %v2137 = vpack.c.b16 %v1121, %v1113
  %v2138 = vpack.c.b16 %v1122, %v1114
  %v2139 = vpack.c.b16 %v1123, %v1115
  %v2140 = vpack.c.b16 %v1124, %v1116
  %v2141 = vpack.c.b16 %v1125, %v1117
  %v2142 = vpack.c.b16 %v1126, %v1118
  %v2143 = vpack.c.b16 %v1127, %v1119
  %v2144 = vpack.c.b16 %v1136, %v1128
  %v2145 = vpack.c.b16 %v1137, %v1129
  %v2146 = vpack.c.b16 %v1138, %v1130
  %v2147 = vpack.c.b16 %v1139, %v1131
  %v2148 = vpack.c.b16 %v1140, %v1132
  %v2149 = vpack.c.b16 %v1141, %v1133
  %v2150 = vpack.c.b16 %v1142, %v1134
  %v2151 = vpack.c.b16 %v1143, %v1135
  %v2152 = vpack.c.b16 %v1152, %v1144
  %v2153 = vpack.c.b16 %v1153, %v1145
  %v2154 = vpack.c.b16 %v1154, %v1146
  %v2155 = vpack.c.b16 %v1155, %v1147
  %v2156 = vpack.c.b16 %v1156, %v1148
  %v2157 = vpack.c.b16 %v1157, %v1149
  %v2158 = vpack.c.b16 %v1158, %v1150
  %v2159 = vpack.c.b16 %v1159, %v1151
  %v2160 = vpack.c.b16 %v1168, %v1160
  %v2161 = vpack.c.b16 %v1169, %v1161
  %v2162 = vpack.c.b16 %v1170, %v1162
  %v2163 = vpack.c.b16 %v1171, %v1163
  %v2164 = vpack.c.b16 %v1172, %v1164
  %v2165 = vpack.c.b16 %v1173, %v1165
  %v2166 = vpack.c.b16 %v1174, %v1166
  %v2167 = vpack.c.b16 %v1175, %v1167
  %v2168 = vpack.c.b16 %v1184, %v1176
  %v2169 = vpack.c.b16 %v1185, %v1177
  %v2170 = vpack.c.b16 %v1186, %v1178
  %v2171 = vpack.c.b16 %v1187, %v1179
  %v2172 = vpack.c.b16 %v1188, %v1180
  %v2173 = vpack.c.b16 %v1189, %v1181
  %v2174 = vpack.c.b16 %v1190, %v1182
  %v2175 = vpack.c.b16 %v1191, %v1183
  %v2176 = vpack.c.b16 %v1200, %v1192
  %v2177 = vpack.c.b16 %v1201, %v1193
  %v2178 = vpack.c.b16 %v1202, %v1194
  %v2179 = vpack.c.b16 %v1203, %v1195
  %v2180 = vpack.c.b16 %v1204, %v1196
  %v2181 = vpack.c.b16 %v1205, %v1197
  %v2182 = vpack.c.b16 %v1206, %v1198
  %v2183 = vpack.c.b16 %v1207, %v1199
  %v2184 = vpack.c.b16 %v1216, %v1208
  %v2185 = vpack.c.b16 %v1217, %v1209
  %v2186 = vpack.c.b16 %v1218, %v1210
  %v2187 = vpack.c.b16 %v1219, %v1211
  %v2188 = vpack.c.b16 %v1220, %v1212
  %v2189 = vpack.c.b16 %v1221, %v1213
  %v2190 = vpack.c.b16 %v1222, %v1214
  %v2191 = vpack.c.b16 %v1223, %v1215
  %v2192 = vpack.c.b16 %v1232, %v1224
  %v2193 = vpack.c.b16 %v1233, %v1225
  %v2194 = vpack.c.b16 %v1234, %v1226
  %v2195 = vpack.c.b16 %v1235, %v1227
  %v2196 = vpack.c.b16 %v1236, %v1228
  %v2197 = vpack.c.b16 %v1237, %v1229
  %v2198 = vpack.c.b16 %v1238, %v1230
  %v2199 = vpack.c.b16 %v1239, %v1231
  %v2200 = vpack.c.b16 %v1248, %v1240
  %v2201 = vpack.c.b16 %v1249, %v1241
  %v2202 = vpack.c.b16 %v1250, %v1242
  %v2203 = vpack.c.b16 %v1251, %v1243
  %v2204 = vpack.c.b16 %v1252, %v1244
  %v2205 = vpack.c.b16 %v1253, %v1245
  %v2206 = vpack.c.b16 %v1254, %v1246
  %v2207 = vpack.c.b16 %v1255, %v1247
  %v2208 = vpack.c.b16 %v1264, %v1256
  %v2209 = vpack.c.b16 %v1265, %v1257
  %v2210 = vpack.c.b16 %v1266, %v1258
  %v2211 = vpack.c.b16 %v1267, %v1259
  %v2212 = vpack.c.b16 %v1268, %v1260
  %v2213 = vpack.c.b16 %v1269, %v1261
  %v2214 = vpack.c.b16 %v1270, %v1262
  %v2215 = vpack.c.b16 %v1271, %v1263
  %v2216 = vpack.c.b16 %v1280, %v1272
  %v2217 = vpack.c.b16 %v1281, %v1273
  %v2218 = vpack.c.b16 %v1282, %v1274
  %v2219 = vpack.c.b16 %v1283, %v1275
  %v2220 = vpack.c.b16 %v1284, %v1276
  %v2221 = vpack.c.b16 %v1285, %v1277
  %v2222 = vpack.c.b16 %v1286, %v1278
  %v2223 = vpack.c.b16 %v1287, %v1279
  %v2224 = vpack.c.b16 %v1296, %v1288
  %v2225 = vpack.c.b16 %v1297, %v1289
  %v2226 = vpack.c.b16 %v1298, %v1290
  %v2227 = vpack.c.b16 %v1299, %v1291
  %v2228 = vpack.c.b16 %v1300, %v1292
  %v2229 = vpack.c.b16 %v1301, %v1293
  %v2230 = vpack.c.b16 %v1302, %v1294
  %v2231 = vpack.c.b16 %v1303, %v1295
  %v2232 = vpack.c.b16 %v1312, %v1304
  %v2233 = vpack.c.b16 %v1313, %v1305
  %v2234 = vpack.c.b16 %v1314, %v1306
  %v2235 = vpack.c.b16 %v1315, %v1307
  %v2236 = vpack.c.b16 %v1316, %v1308
  %v2237 = vpack.c.b16 %v1317, %v1309
  %v2238 = vpack.c.b16 %v1318, %v1310
  %v2239 = vpack.c.b16 %v1319, %v1311
  %v2240 = vpack.c.b16 %v1328, %v1320
  %v2241 = vpack.c.b16 %v1329, %v1321
  %v2242 = vpack.c.b16 %v1330, %v1322
  %v2243 = vpack.c.b16 %v1331, %v1323
  %v2244 = vpack.c.b16 %v1332, %v1324
  %v2245 = vpack.c.b16 %v1333, %v1325
  %v2246 = vpack.c.b16 %v1334, %v1326
  %v2247 = vpack.c.b16 %v1335, %v1327
  %v2248 = vpack.c.b16 %v1344, %v1336
  %v2249 = vpack.c.b16 %v1345, %v1337
  %v2250 = vpack.c.b16 %v1346, %v1338
  %v2251 = vpack.c.b16 %v1347, %v1339
  %v2252 = vpack.c.b16 %v1348, %v1340
  %v2253 = vpack.c.b16 %v1349, %v1341
  %v2254 = vpack.c.b16 %v1350, %v1342
  %v2255 = vpack.c.b16 %v1351, %v1343
  %v2256 = vpack.c.b16 %v1360, %v1352
  %v2257 = vpack.c.b16 %v1361, %v1353
  %v2258 = vpack.c.b16 %v1362, %v1354
  %v2259 = vpack.c.b16 %v1363, %v1355
  %v2260 = vpack.c.b16 %v1364, %v1356
  %v2261 = vpack.c.b16 %v1365, %v1357
  %v2262 = vpack.c.b16 %v1366, %v1358
  %v2263 = vpack.c.b16 %v1367, %v1359
  %v2264 = vpack.c.b16 %v1376, %v1368
  %v2265 = vpack.c.b16 %v1377, %v1369
  %v2266 = vpack.c.b16 %v1378, %v1370
  %v2267 = vpack.c.b16 %v1379, %v1371
  %v2268 = vpack.c.b16 %v1380, %v1372
  %v2269 = vpack.c.b16 %v1381, %v1373
  %v2270 = vpack.c.b16 %v1382, %v1374
  %v2271 = vpack.c.b16 %v1383, %v1375
  %v2272 = vpack.c.b16 %v1392, %v1384
  %v2273 = vpack.c.b16 %v1393, %v1385
  %v2274 = vpack.c.b16 %v1394, %v1386
  %v2275 = vpack.c.b16 %v1395, %v1387
  %v2276 = vpack.c.b16 %v1396, %v1388
  %v2277 = vpack.c.b16 %v1397, %v1389
  %v2278 = vpack.c.b16 %v1398, %v1390
  %v2279 = vpack.c.b16 %v1399, %v1391
  %v2280 = vpack.c.b16 %v1408, %v1400
  %v2281 = vpack.c.b16 %v1409, %v1401
  %v2282 = vpack.c.b16 %v1410, %v1402
  %v2283 = vpack.c.b16 %v1411, %v1403
  %v2284 = vpack.c.b16 %v1412, %v1404
  %v2285 = vpack.c.b16 %v1413, %v1405
  %v2286 = vpack.c.b16 %v1414, %v1406
  %v2287 = vpack.c.b16 %v1415, %v1407
  %v2288 = vpack.c.b16 %v1424, %v1416
  %v2289 = vpack.c.b16 %v1425, %v1417
  %v2290 = vpack.c.b16 %v1426, %v1418
  %v2291 = vpack.c.b16 %v1427, %v1419
  %v2292 = vpack.c.b16 %v1428, %v1420
  %v2293 = vpack.c.b16 %v1429, %v1421
  %v2294 = vpack.c.b16 %v1430, %v1422
  %v2295 = vpack.c.b16 %v1431, %v1423
  %v2296 = vpack.c.b16 %v1440, %v1432
  %v2297 = vpack.c.b16 %v1441, %v1433
  %v2298 = vpack.c.b16 %v1442, %v1434
  %v2299 = vpack.c.b16 %v1443, %v1435
  %v2300 = vpack.c.b16 %v1444, %v1436
  %v2301 = vpack.c.b16 %v1445, %v1437
  %v2302 = vpack.c.b16 %v1446, %v1438
  %v2303 = vpack.c.b16 %v1447, %v1439
  %v2304 = vpack.c.b16 %v1456, %v1448
  %v2305 = vpack.c.b16 %v1457, %v1449
  %v2306 = vpack.c.b16 %v1458, %v1450
  %v2307 = vpack.c.b16 %v1459, %v1451
  %v2308 = vpack.c.b16 %v1460, %v1452
  %v2309 = vpack.c.b16 %v1461, %v1453
  %v2310 = vpack.c.b16 %v1462, %v1454
  %v2311 = vpack.c.b16 %v1463, %v1455
  %v2312 = vpack.c.b16 %v1472, %v1464
  %v2313 = vpack.c.b16 %v1473, %v1465
  %v2314 = vpack.c.b16 %v1474, %v1466
  %v2315 = vpack.c.b16 %v1475, %v1467
  %v2316 = vpack.c.b16 %v1476, %v1468
  %v2317 = vpack.c.b16 %v1477, %v1469
  %v2318 = vpack.c.b16 %v1478, %v1470
  %v2319 = vpack.c.b16 %v1479, %v1471
  %v2320 = vpack.c.b16 %v1488, %v1480
  %v2321 = vpack.c.b16 %v1489, %v1481
  %v2322 = vpack.c.b16 %v1490, %v1482
  %v2323 = vpack.c.b16 %v1491, %v1483
  %v2324 = vpack.c.b16 %v1492, %v1484
  %v2325 = vpack.c.b16 %v1493, %v1485
  %v2326 = vpack.c.b16 %v1494, %v1486
  %v2327 = vpack.c.b16 %v1495, %v1487
  %v2328 = vpack.c.b16 %v1504, %v1496
  %v2329 = vpack.c.b16 %v1505, %v1497
  %v2330 = vpack.c.b16 %v1506, %v1498
  %v2331 = vpack.c.b16 %v1507, %v1499
  %v2332 = vpack.c.b16 %v1508, %v1500
  %v2333 = vpack.c.b16 %v1509, %v1501
  %v2334 = vpack.c.b16 %v1510, %v1502
  %v2335 = vpack.c.b16 %v1511, %v1503
  %v2336 = vpack.c.b16 %v1520, %v1512
  %v2337 = vpack.c.b16 %v1521, %v1513
  %v2338 = vpack.c.b16 %v1522, %v1514
  %v2339 = vpack.c.b16 %v1523, %v1515
  %v2340 = vpack.c.b16 %v1524, %v1516
  %v2341 = vpack.c.b16 %v1525, %v1517
  %v2342 = vpack.c.b16 %v1526, %v1518
  %v2343 = vpack.c.b16 %v1527, %v1519
  %v2344 = vpack.c.b16 %v1536, %v1528
  %v2345 = vpack.c.b16 %v1537, %v1529
  %v2346 = vpack.c.b16 %v1538, %v1530
  %v2347 = vpack.c.b16 %v1539, %v1531
  %v2348 = vpack.c.b16 %v1540, %v1532
  %v2349 = vpack.c.b16 %v1541, %v1533
  %v2350 = vpack.c.b16 %v1542, %v1534
  %v2351 = vpack.c.b16 %v1543, %v1535
  %v2352 = vpack.c.b16 %v1552, %v1544
  %v2353 = vpack.c.b16 %v1553, %v1545
  %v2354 = vpack.c.b16 %v1554, %v1546
  %v2355 = vpack.c.b16 %v1555, %v1547
  %v2356 = vpack.c.b16 %v1556, %v1548
  %v2357 = vpack.c.b16 %v1557, %v1549
  %v2358 = vpack.c.b16 %v1558, %v1550
  %v2359 = vpack.c.b16 %v1559, %v1551
  %v2360 = vpack.c.b16 %v1568, %v1560
  %v2361 = vpack.c.b16 %v1569, %v1561
  %v2362 = vpack.c.b16 %v1570, %v1562
  %v2363 = vpack.c.b16 %v1571, %v1563
  %v2364 = vpack.c.b16 %v1572, %v1564
  %v2365 = vpack.c.b16 %v1573, %v1565
  %v2366 = vpack.c.b16 %v1574, %v1566
  %v2367 = vpack.c.b16 %v1575, %v1567
  %v2368 = vpack.c.b16 %v1584, %v1576
  %v2369 = vpack.c.b16 %v1585, %v1577
  %v2370 = vpack.c.b16 %v1586, %v1578
  %v2371 = vpack.c.b16 %v1587, %v1579
  %v2372 = vpack.c.b16 %v1588, %v1580
  %v2373 = vpack.c.b16 %v1589, %v1581
  %v2374 = vpack.c.b16 %v1590, %v1582
  %v2375 = vpack.c.b16 %v1591, %v1583
  %v2376 = vpack.c.b16 %v1600, %v1592
  %v2377 = vpack.c.b16 %v1601, %v1593
  %v2378 = vpack.c.b16 %v1602, %v1594
  %v2379 = vpack.c.b16 %v1603, %v1595
  %v2380 = vpack.c.b16 %v1604, %v1596
  %v2381 = vpack.c.b16 %v1605, %v1597
  %v2382 = vpack.c.b16 %v1606, %v1598
  %v2383 = vpack.c.b16 %v1607, %v1599
  %v2384 = vpack.c.b16 %v1616, %v1608
  %v2385 = vpack.c.b16 %v1617, %v1609
  %v2386 = vpack.c.b16 %v1618, %v1610
  %v2387 = vpack.c.b16 %v1619, %v1611
  %v2388 = vpack.c.b16 %v1620, %v1612
  %v2389 = vpack.c.b16 %v1621, %v1613
  %v2390 = vpack.c.b16 %v1622, %v1614
  %v2391 = vpack.c.b16 %v1623, %v1615
  %v2392 = vpack.c.b16 %v1632, %v1624
  %v2393 = vpack.c.b16 %v1633, %v1625
  %v2394 = vpack.c.b16 %v1634, %v1626
  %v2395 = vpack.c.b16 %v1635, %v1627
  %v2396 = vpack.c.b16 %v1636, %v1628
  %v2397 = vpack.c.b16 %v1637, %v1629
  %v2398 = vpack.c.b16 %v1638, %v1630
  %v2399 = vpack.c.b16 %v1639, %v1631
  %v2400 = vpack.c.b16 %v1648, %v1640
  %v2401 = vpack.c.b16 %v1649, %v1641
  %v2402 = vpack.c.b16 %v1650, %v1642
  %v2403 = vpack.c.b16 %v1651, %v1643
  %v2404 = vpack.c.b16 %v1652, %v1644
  %v2405 = vpack.c.b16 %v1653, %v1645
  %v2406 = vpack.c.b16 %v1654, %v1646
  %v2407 = vpack.c.b16 %v1655, %v1647
  %v2408 = vpack.c.b16 %v1664, %v1656
  %v2409 = vpack.c.b16 %v1665, %v1657
  %v2410 = vpack.c.b16 %v1666, %v1658
  %v2411 = vpack.c.b16 %v1667, %v1659
  %v2412 = vpack.c.b16 %v1668, %v1660
  %v2413 = vpack.c.b16 %v1669, %v1661
  %v2414 = vpack.c.b16 %v1670, %v1662
  %v2415 = vpack.c.b16 %v1671, %v1663
  %v2416 = vpack.c.b16 %v1680, %v1672
  %v2417 = vpack.c.b16 %v1681, %v1673
  %v2418 = vpack.c.b16 %v1682, %v1674
  %v2419 = vpack.c.b16 %v1683, %v1675
  %v2420 = vpack.c.b16 %v1684, %v1676
  %v2421 = vpack.c.b16 %v1685, %v1677
  %v2422 = vpack.c.b16 %v1686, %v1678
  %v2423 = vpack.c.b16 %v1687, %v1679
  %v2424 = vpack.c.b16 %v1696, %v1688
  %v2425 = vpack.c.b16 %v1697, %v1689
  %v2426 = vpack.c.b16 %v1698, %v1690
  %v2427 = vpack.c.b16 %v1699, %v1691
  %v2428 = vpack.c.b16 %v1700, %v1692
  %v2429 = vpack.c.b16 %v1701, %v1693
  %v2430 = vpack.c.b16 %v1702, %v1694
  %v2431 = vpack.c.b16 %v1703, %v1695
  %v2432 = vpack.c.b16 %v1712, %v1704
  %v2433 = vpack.c.b16 %v1713, %v1705
  %v2434 = vpack.c.b16 %v1714, %v1706
  %v2435 = vpack.c.b16 %v1715, %v1707
  %v2436 = vpack.c.b16 %v1716, %v1708
  %v2437 = vpack.c.b16 %v1717, %v1709
  %v2438 = vpack.c.b16 %v1718, %v1710
  %v2439 = vpack.c.b16 %v1719, %v1711
  %v2440 = vpack.c.b16 %v1728, %v1720
  %v2441 = vpack.c.b16 %v1729, %v1721
  %v2442 = vpack.c.b16 %v1730, %v1722
  %v2443 = vpack.c.b16 %v1731, %v1723
  %v2444 = vpack.c.b16 %v1732, %v1724
  %v2445 = vpack.c.b16 %v1733, %v1725
  %v2446 = vpack.c.b16 %v1734, %v1726
  %v2447 = vpack.c.b16 %v1735, %v1727
  %v2448 = vpack.c.b16 %v1744, %v1736
  %v2449 = vpack.c.b16 %v1745, %v1737
  %v2450 = vpack.c.b16 %v1746, %v1738
  %v2451 = vpack.c.b16 %v1747, %v1739
  %v2452 = vpack.c.b16 %v1748, %v1740
  %v2453 = vpack.c.b16 %v1749, %v1741
  %v2454 = vpack.c.b16 %v1750, %v1742
  %v2455 = vpack.c.b16 %v1751, %v1743
  %v2456 = vpack.c.b16 %v1760, %v1752
  %v2457 = vpack.c.b16 %v1761, %v1753
  %v2458 = vpack.c.b16 %v1762, %v1754
  %v2459 = vpack.c.b16 %v1763, %v1755
  %v2460 = vpack.c.b16 %v1764, %v1756
  %v2461 = vpack.c.b16 %v1765, %v1757
  %v2462 = vpack.c.b16 %v1766, %v1758
  %v2463 = vpack.c.b16 %v1767, %v1759
  %v2464 = vpack.c.b16 %v1776, %v1768
  %v2465 = vpack.c.b16 %v1777, %v1769
  %v2466 = vpack.c.b16 %v1778, %v1770
  %v2467 = vpack.c.b16 %v1779, %v1771
  %v2468 = vpack.c.b16 %v1780, %v1772
  %v2469 = vpack.c.b16 %v1781, %v1773
  %v2470 = vpack.c.b16 %v1782, %v1774
  %v2471 = vpack.c.b16 %v1783, %v1775
  %v2472 = vpack.c.b16 %v1792, %v1784
  %v2473 = vpack.c.b16 %v1793, %v1785
  %v2474 = vpack.c.b16 %v1794, %v1786
  %v2475 = vpack.c.b16 %v1795, %v1787
  %v2476 = vpack.c.b16 %v1796, %v1788
  %v2477 = vpack.c.b16 %v1797, %v1789
  %v2478 = vpack.c.b16 %v1798, %v1790
  %v2479 = vpack.c.b16 %v1799, %v1791
  %v2480 = vpack.c.b16 %v1808, %v1800
  %v2481 = vpack.c.b16 %v1809, %v1801
  %v2482 = vpack.c.b16 %v1810, %v1802
  %v2483 = vpack.c.b16 %v1811, %v1803
  %v2484 = vpack.c.b16 %v1812, %v1804
  %v2485 = vpack.c.b16 %v1813, %v1805
  %v2486 = vpack.c.b16 %v1814, %v1806
  %v2487 = vpack.c.b16 %v1815, %v1807
  %v2488 = vpack.c.b16 %v1824, %v1816
  %v2489 = vpack.c.b16 %v1825, %v1817
  %v2490 = vpack.c.b16 %v1826, %v1818
  %v2491 = vpack.c.b16 %v1827, %v1819
  %v2492 = vpack.c.b16 %v1828, %v1820
  %v2493 = vpack.c.b16 %v1829, %v1821
  %v2494 = vpack.c.b16 %v1830, %v1822
  %v2495 = vpack.c.b16 %v1831, %v1823
  %v2496 = vpack.c.b16 %v1840, %v1832
  %v2497 = vpack.c.b16 %v1841, %v1833
  %v2498 = vpack.c.b16 %v1842, %v1834
  %v2499 = vpack.c.b16 %v1843, %v1835
  %v2500 = vpack.c.b16 %v1844, %v1836
  %v2501 = vpack.c.b16 %v1845, %v1837
  %v2502 = vpack.c.b16 %v1846, %v1838
  %v2503 = vpack.c.b16 %v1847, %v1839
  %v2504 = vpack.c.b16 %v1856, %v1848
  %v2505 = vpack.c.b16 %v1857, %v1849
  %v2506 = vpack.c.b16 %v1858, %v1850
  %v2507 = vpack.c.b16 %v1859, %v1851
  %v2508 = vpack.c.b16 %v1860, %v1852
  %v2509 = vpack.c.b16 %v1861, %v1853
  %v2510 = vpack.c.b16 %v1862, %v1854
  %v2511 = vpack.c.b16 %v1863, %v1855
  %v2512 = vpack.c.b16 %v1872, %v1864
  %v2513 = vpack.c.b16 %v1873, %v1865
  %v2514 = vpack.c.b16 %v1874, %v1866
  %v2515 = vpack.c.b16 %v1875, %v1867
  %v2516 = vpack.c.b16 %v1876, %v1868
  %v2517 = vpack.c.b16 %v1877, %v1869
  %v2518 = vpack.c.b16 %v1878, %v1870
  %v2519 = vpack.c.b16 %v1879, %v1871
  %v2520 = vpack.c.b16 %v1888, %v1880
  %v2521 = vpack.c.b16 %v1889, %v1881
  %v2522 = vpack.c.b16 %v1890, %v1882
  %v2523 = vpack.c.b16 %v1891, %v1883
  %v2524 = vpack.c.b16 %v1892, %v1884
  %v2525 = vpack.c.b16 %v1893, %v1885
  %v2526 = vpack.c.b16 %v1894, %v1886
  %v2527 = vpack.c.b16 %v1895, %v1887
  %v2528 = vpack.c.b16 %v1904, %v1896
  %v2529 = vpack.c.b16 %v1905, %v1897
  %v2530 = vpack.c.b16 %v1906, %v1898
  %v2531 = vpack.c.b16 %v1907, %v1899
  %v2532 = vpack.c.b16 %v1908, %v1900
  %v2533 = vpack.c.b16 %v1909, %v1901
  %v2534 = vpack.c.b16 %v1910, %v1902
  %v2535 = vpack.c.b16 %v1911, %v1903
  %v2536 = vpack.c.b16 %v1920, %v1912
  %v2537 = vpack.c.b16 %v1921, %v1913
  %v2538 = vpack.c.b16 %v1922, %v1914
  %v2539 = vpack.c.b16 %v1923, %v1915
  %v2540 = vpack.c.b16 %v1924, %v1916
  %v2541 = vpack.c.b16 %v1925, %v1917
  %v2542 = vpack.c.b16 %v1926, %v1918
  %v2543 = vpack.c.b16 %v1927, %v1919
  %v2544 = vpack.c.b16 %v1936, %v1928
  %v2545 = vpack.c.b16 %v1937, %v1929
  %v2546 = vpack.c.b16 %v1938, %v1930
  %v2547 = vpack.c.b16 %v1939, %v1931
  %v2548 = vpack.c.b16 %v1940, %v1932
  %v2549 = vpack.c.b16 %v1941, %v1933
  %v2550 = vpack.c.b16 %v1942, %v1934
  %v2551 = vpack.c.b16 %v1943, %v1935
  %v2552 = vpack.c.b16 %v1952, %v1944
  %v2553 = vpack.c.b16 %v1953, %v1945
  %v2554 = vpack.c.b16 %v1954, %v1946
  %v2555 = vpack.c.b16 %v1955, %v1947
  %v2556 = vpack.c.b16 %v1956, %v1948
  %v2557 = vpack.c.b16 %v1957, %v1949
  %v2558 = vpack.c.b16 %v1958, %v1950
  %v2559 = vpack.c.b16 %v1959, %v1951
  %v2560 = vpack.c.b16 %v1968, %v1960
  %v2561 = vpack.c.b16 %v1969, %v1961
  %v2562 = vpack.c.b16 %v1970, %v1962
  %v2563 = vpack.c.b16 %v1971, %v1963
  %v2564 = vpack.c.b16 %v1972, %v1964
  %v2565 = vpack.c.b16 %v1973, %v1965
  %v2566 = vpack.c.b16 %v1974, %v1966
  %v2567 = vpack.c.b16 %v1975, %v1967
  %v2568 = vpack.c.b16 %v1984, %v1976
  %v2569 = vpack.c.b16 %v1985, %v1977
  %v2570 = vpack.c.b16 %v1986, %v1978
  %v2571 = vpack.c.b16 %v1987, %v1979
  %v2572 = vpack.c.b16 %v1988, %v1980
  %v2573 = vpack.c.b16 %v1989, %v1981
  %v2574 = vpack.c.b16 %v1990, %v1982
  %v2575 = vpack.c.b16 %v1991, %v1983
  %v2576 = vpack.c.b16 %v2000, %v1992
  %v2577 = vpack.c.b16 %v2001, %v1993
  %v2578 = vpack.c.b16 %v2002, %v1994
  %v2579 = vpack.c.b16 %v2003, %v1995
  %v2580 = vpack.c.b16 %v2004, %v1996
  %v2581 = vpack.c.b16 %v2005, %v1997
  %v2582 = vpack.c.b16 %v2006, %v1998
  %v2583 = vpack.c.b16 %v2007, %v1999
  %v2584 = vpack.c.b16 %v2016, %v2008
  %v2585 = vpack.c.b16 %v2017, %v2009
  %v2586 = vpack.c.b16 %v2018, %v2010
  %v2587 = vpack.c.b16 %v2019, %v2011
  %v2588 = vpack.c.b16 %v2020, %v2012
  %v2589 = vpack.c.b16 %v2021, %v2013
  %v2590 = vpack.c.b16 %v2022, %v2014
  %v2591 = vpack.c.b16 %v2023, %v2015
  %v2592 = vpack.c.b16 %v2032, %v2024
  %v2593 = vpack.c.b16 %v2033, %v2025
  %v2594 = vpack.c.b16 %v2034, %v2026
  %v2595 = vpack.c.b16 %v2035, %v2027
  %v2596 = vpack.c.b16 %v2036, %v2028
  %v2597 = vpack.c.b16 %v2037, %v2029
  %v2598 = vpack.c.b16 %v2038, %v2030
  %v2599 = vpack.c.b16 %v2039, %v2031
  %v2600 = vpack.c.b16 %v2048, %v2040
  %v2601 = vpack.c.b16 %v2049, %v2041
  %v2602 = vpack.c.b16 %v2050, %v2042
  %v2603 = vpack.c.b16 %v2051, %v2043
  %v2604 = vpack.c.b16 %v2052, %v2044
  %v2605 = vpack.c.b16 %v2053, %v2045
  %v2606 = vpack.c.b16 %v2054, %v2046
  %v2607 = vpack.c.b16 %v2055, %v2047
  %v2608 = vpack.c.b16 %v2064, %v2056
  %v2609 = vpack.c.b16 %v2065, %v2057
  %v2610 = vpack.c.b16 %v2066, %v2058
  %v2611 = vpack.c.b16 %v2067, %v2059
  %v2612 = vpack.c.b16 %v2068, %v2060
  %v2613 = vpack.c.b16 %v2069, %v2061
  %v2614 = vpack.c.b16 %v2070, %v2062
  %v2615 = vpack.c.b16 %v2071, %v2063
  %v2616 = vpack.c.b16 %v2080, %v2072
  %v2617 = vpack.c.b16 %v2081, %v2073
  %v2618 = vpack.c.b16 %v2082, %v2074
  %v2619 = vpack.c.b16 %v2083, %v2075
  %v2620 = vpack.c.b16 %v2084, %v2076
  %v2621 = vpack.c.b16 %v2085, %v2077
  %v2622 = vpack.c.b16 %v2086, %v2078
  %v2623 = vpack.c.b16 %v2087, %v2079
  %v2624 = vpack.c.b16 %v2096, %v2088
  %v2625 = vpack.c.b16 %v2097, %v2089
  %v2626 = vpack.c.b16 %v2098, %v2090
  %v2627 = vpack.c.b16 %v2099, %v2091
  %v2628 = vpack.c.b16 %v2100, %v2092
  %v2629 = vpack.c.b16 %v2101, %v2093
  %v2630 = vpack.c.b16 %v2102, %v2094
  %v2631 = vpack.c.b16 %v2103, %v2095
  %v2632 = vpack.c.b16 %v2112, %v2104
  %v2633 = vpack.c.b16 %v2113, %v2105
  %v2634 = vpack.c.b16 %v2114, %v2106
  %v2635 = vpack.c.b16 %v2115, %v2107
  %v2636 = vpack.c.b16 %v2116, %v2108
  %v2637 = vpack.c.b16 %v2117, %v2109
  %v2638 = vpack.c.b16 %v2118, %v2110
  %v2639 = vpack.c.b16 %v2119, %v2111
  %v2640 = vpack.c.b16 %v2128, %v2120
  %v2641 = vpack.c.b16 %v2129, %v2121
  %v2642 = vpack.c.b16 %v2130, %v2122
  %v2643 = vpack.c.b16 %v2131, %v2123
  %v2644 = vpack.c.b16 %v2132, %v2124
  %v2645 = vpack.c.b16 %v2133, %v2125
  %v2646 = vpack.c.b16 %v2134, %v2126
  %v2647 = vpack.c.b16 %v2135, %v2127
  %3160 = vmatprep.subr.bf16.mxu0 %v2137
  %3161 = vmatpush1.bf16.msra.mxu0 %v2136
  %3162 = vmatprep.subr.bf16.mxu0 %v2145
  %3163 = vmatpush1.bf16.msra.mxu0 %v2144
  %3164 = vmatprep.subr.bf16.mxu0 %v2153
  %3165 = vmatpush1.bf16.msra.mxu0 %v2152
  %3166 = vmatprep.subr.bf16.mxu0 %v2161
  %3167 = vmatpush1.bf16.msra.mxu0 %v2160
  %3168 = vmatprep.subr.bf16.mxu0 %v2169
  %3169 = vmatpush1.bf16.msra.mxu0 %v2168
  %3170 = vmatprep.subr.bf16.mxu0 %v2177
  %3171 = vmatpush1.bf16.msra.mxu0 %v2176
  %3172 = vmatprep.subr.bf16.mxu0 %v2185
  %3173 = vmatpush1.bf16.msra.mxu0 %v2184
  %3174 = vmatprep.subr.bf16.mxu0 %v2193
  %3175 = vmatpush1.bf16.msra.mxu0 %v2192
  %3176 = vmatprep.subr.bf16.mxu0 %v2201
  %3177 = vmatpush1.bf16.msra.mxu0 %v2200
  %3178 = vmatprep.subr.bf16.mxu0 %v2209
  %3179 = vmatpush1.bf16.msra.mxu0 %v2208
  %3180 = vmatprep.subr.bf16.mxu0 %v2217
  %3181 = vmatpush1.bf16.msra.mxu0 %v2216
  %3182 = vmatprep.subr.bf16.mxu0 %v2225
  %3183 = vmatpush1.bf16.msra.mxu0 %v2224
  %3184 = vmatprep.subr.bf16.mxu0 %v2233
  %3185 = vmatpush1.bf16.msra.mxu0 %v2232
  %3186 = vmatprep.subr.bf16.mxu0 %v2241
  %3187 = vmatpush1.bf16.msra.mxu0 %v2240
  %3188 = vmatprep.subr.bf16.mxu0 %v2249
  %3189 = vmatpush1.bf16.msra.mxu0 %v2248
  %3190 = vmatprep.subr.bf16.mxu0 %v2257
  %3191 = vmatpush1.bf16.msra.mxu0 %v2256
  %3192 = vmatprep.mubr.bf16.mxu0 %v585
  %3193 = vmatmul.mubr.bf16.gmra.mrb[0].mxu0 %v584
  %v3194 = vpop.f32.mrb[0].mxu0
  %v3195 = vadd.f32 %v535, %v3194
  %v3196 = vpop.f32.mrb[0].mxu0
  %v3197 = vadd.f32 %v539, %v3196
  %v3198 = vpop.f32.mrb[0].mxu0
  %v3199 = vpop.f32.mrb[0].mxu0
  %3200 = vdwg.mxu0
  %3201 = vmatprep.subr.bf16.mxu0 %v2265
  %3202 = vmatpush1.bf16.msra.mxu0 %v2264
  %3203 = vmatprep.subr.bf16.mxu0 %v2273
  %3204 = vmatpush1.bf16.msra.mxu0 %v2272
  %3205 = vmatprep.subr.bf16.mxu0 %v2281
  %3206 = vmatpush1.bf16.msra.mxu0 %v2280
  %3207 = vmatprep.subr.bf16.mxu0 %v2289
  %3208 = vmatpush1.bf16.msra.mxu0 %v2288
  %3209 = vmatprep.subr.bf16.mxu0 %v2297
  %3210 = vmatpush1.bf16.msra.mxu0 %v2296
  %3211 = vmatprep.subr.bf16.mxu0 %v2305
  %3212 = vmatpush1.bf16.msra.mxu0 %v2304
  %3213 = vmatprep.subr.bf16.mxu0 %v2313
  %3214 = vmatpush1.bf16.msra.mxu0 %v2312
  %3215 = vmatprep.subr.bf16.mxu0 %v2321
  %3216 = vmatpush1.bf16.msra.mxu0 %v2320
  %3217 = vmatprep.subr.bf16.mxu0 %v2329
  %3218 = vmatpush1.bf16.msra.mxu0 %v2328
  %3219 = vmatprep.subr.bf16.mxu0 %v2337
  %3220 = vmatpush1.bf16.msra.mxu0 %v2336
  %3221 = vmatprep.subr.bf16.mxu0 %v2345
  %3222 = vmatpush1.bf16.msra.mxu0 %v2344
  %3223 = vmatprep.subr.bf16.mxu0 %v2353
  %3224 = vmatpush1.bf16.msra.mxu0 %v2352
  %3225 = vmatprep.subr.bf16.mxu0 %v2361
  %3226 = vmatpush1.bf16.msra.mxu0 %v2360
  %3227 = vmatprep.subr.bf16.mxu0 %v2369
  %3228 = vmatpush1.bf16.msra.mxu0 %v2368
  %3229 = vmatprep.subr.bf16.mxu0 %v2377
  %3230 = vmatpush1.bf16.msra.mxu0 %v2376
  %3231 = vmatprep.subr.bf16.mxu0 %v2385
  %3232 = vmatpush1.bf16.msra.mxu0 %v2384
  %3233 = vmatprep.mubr.bf16.mxu0 %v587
  %3234 = vmatmul.mubr.bf16.gmra.mrb[0].mxu0 %v586
  %v3235 = vpop.f32.mrb[0].mxu0
  %v3236 = vadd.f32 %v3195, %v3235
  %v3237 = vpop.f32.mrb[0].mxu0
  %v3238 = vadd.f32 %v3197, %v3237
  %v3239 = vpop.f32.mrb[0].mxu0
  %v3240 = vpop.f32.mrb[0].mxu0
  %3241 = vdwg.mxu0
  %3242 = vmatprep.subr.bf16.mxu0 %v2393
  %3243 = vmatpush1.bf16.msra.mxu0 %v2392
  %3244 = vmatprep.subr.bf16.mxu0 %v2401
  %3245 = vmatpush1.bf16.msra.mxu0 %v2400
  %3246 = vmatprep.subr.bf16.mxu0 %v2409
  %3247 = vmatpush1.bf16.msra.mxu0 %v2408
  %3248 = vmatprep.subr.bf16.mxu0 %v2417
  %3249 = vmatpush1.bf16.msra.mxu0 %v2416
  %3250 = vmatprep.subr.bf16.mxu0 %v2425
  %3251 = vmatpush1.bf16.msra.mxu0 %v2424
  %3252 = vmatprep.subr.bf16.mxu0 %v2433
  %3253 = vmatpush1.bf16.msra.mxu0 %v2432
  %3254 = vmatprep.subr.bf16.mxu0 %v2441
  %3255 = vmatpush1.bf16.msra.mxu0 %v2440
  %3256 = vmatprep.subr.bf16.mxu0 %v2449
  %3257 = vmatpush1.bf16.msra.mxu0 %v2448
  %3258 = vmatprep.subr.bf16.mxu0 %v2457
  %3259 = vmatpush1.bf16.msra.mxu0 %v2456
  %3260 = vmatprep.subr.bf16.mxu0 %v2465
  %3261 = vmatpush1.bf16.msra.mxu0 %v2464
  %3262 = vmatprep.subr.bf16.mxu0 %v2473
  %3263 = vmatpush1.bf16.msra.mxu0 %v2472
  %3264 = vmatprep.subr.bf16.mxu0 %v2481
  %3265 = vmatpush1.bf16.msra.mxu0 %v2480
  %3266 = vmatprep.subr.bf16.mxu0 %v2489
  %3267 = vmatpush1.bf16.msra.mxu0 %v2488
  %3268 = vmatprep.subr.bf16.mxu0 %v2497
  %3269 = vmatpush1.bf16.msra.mxu0 %v2496
  %3270 = vmatprep.subr.bf16.mxu0 %v2505
  %3271 = vmatpush1.bf16.msra.mxu0 %v2504
  %3272 = vmatprep.subr.bf16.mxu0 %v2513
  %3273 = vmatpush1.bf16.msra.mxu0 %v2512
  %3274 = vmatprep.mubr.bf16.mxu0 %v589
  %3275 = vmatmul.mubr.bf16.gmra.mrb[0].mxu0 %v588
  %v3276 = vpop.f32.mrb[0].mxu0
  %v3277 = vadd.f32 %v3236, %v3276
  %v3278 = vpop.f32.mrb[0].mxu0
  %v3279 = vadd.f32 %v3238, %v3278
  %v3280 = vpop.f32.mrb[0].mxu0
  %v3281 = vpop.f32.mrb[0].mxu0
  %3282 = vdwg.mxu0
  %3283 = vmatprep.subr.bf16.mxu0 %v2521
  %3284 = vmatpush1.bf16.msra.mxu0 %v2520
  %3285 = vmatprep.subr.bf16.mxu0 %v2529
  %3286 = vmatpush1.bf16.msra.mxu0 %v2528
  %3287 = vmatprep.subr.bf16.mxu0 %v2537
  %3288 = vmatpush1.bf16.msra.mxu0 %v2536
  %3289 = vmatprep.subr.bf16.mxu0 %v2545
  %3290 = vmatpush1.bf16.msra.mxu0 %v2544
  %3291 = vmatprep.subr.bf16.mxu0 %v2553
  %3292 = vmatpush1.bf16.msra.mxu0 %v2552
  %3293 = vmatprep.subr.bf16.mxu0 %v2561
  %3294 = vmatpush1.bf16.msra.mxu0 %v2560
  %3295 = vmatprep.subr.bf16.mxu0 %v2569
  %3296 = vmatpush1.bf16.msra.mxu0 %v2568
  %3297 = vmatprep.subr.bf16.mxu0 %v2577
  %3298 = vmatpush1.bf16.msra.mxu0 %v2576
  %3299 = vmatprep.subr.bf16.mxu0 %v2585
  %3300 = vmatpush1.bf16.msra.mxu0 %v2584
  %3301 = vmatprep.subr.bf16.mxu0 %v2593
  %3302 = vmatpush1.bf16.msra.mxu0 %v2592
  %3303 = vmatprep.subr.bf16.mxu0 %v2601
  %3304 = vmatpush1.bf16.msra.mxu0 %v2600
  %3305 = vmatprep.subr.bf16.mxu0 %v2609
  %3306 = vmatpush1.bf16.msra.mxu0 %v2608
  %3307 = vmatprep.subr.bf16.mxu0 %v2617
  %3308 = vmatpush1.bf16.msra.mxu0 %v2616
  %3309 = vmatprep.subr.bf16.mxu0 %v2625
  %3310 = vmatpush1.bf16.msra.mxu0 %v2624
  %3311 = vmatprep.subr.bf16.mxu0 %v2633
  %3312 = vmatpush1.bf16.msra.mxu0 %v2632
  %3313 = vmatprep.subr.bf16.mxu0 %v2641
  %3314 = vmatpush1.bf16.msra.mxu0 %v2640
  %3315 = vmatprep.mubr.bf16.mxu0 %v591
  %3316 = vmatmul.mubr.bf16.gmra.mrb[0].mxu0 %v590
  %v3317 = vpop.f32.mrb[0].mxu0
  %v3318 = vadd.f32 %v3277, %v3317
  %v3319 = vpop.f32.mrb[0].mxu0
  %v3320 = vadd.f32 %v3279, %v3319
  %v3321 = vpop.f32.mrb[0].mxu0
  %v3322 = vpop.f32.mrb[0].mxu0
  %3323 = vdwg.mxu0
  %3324 = vmatprep.subr.bf16.mxu0 %v2139
  %3325 = vmatpush1.bf16.msra.mxu0 %v2138
  %3326 = vmatprep.subr.bf16.mxu0 %v2147
  %3327 = vmatpush1.bf16.msra.mxu0 %v2146
  %3328 = vmatprep.subr.bf16.mxu0 %v2155
  %3329 = vmatpush1.bf16.msra.mxu0 %v2154
  %3330 = vmatprep.subr.bf16.mxu0 %v2163
  %3331 = vmatpush1.bf16.msra.mxu0 %v2162
  %3332 = vmatprep.subr.bf16.mxu0 %v2171
  %3333 = vmatpush1.bf16.msra.mxu0 %v2170
  %3334 = vmatprep.subr.bf16.mxu0 %v2179
  %3335 = vmatpush1.bf16.msra.mxu0 %v2178
  %3336 = vmatprep.subr.bf16.mxu0 %v2187
  %3337 = vmatpush1.bf16.msra.mxu0 %v2186
  %3338 = vmatprep.subr.bf16.mxu0 %v2195
  %3339 = vmatpush1.bf16.msra.mxu0 %v2194
  %3340 = vmatprep.subr.bf16.mxu0 %v2203
  %3341 = vmatpush1.bf16.msra.mxu0 %v2202
  %3342 = vmatprep.subr.bf16.mxu0 %v2211
  %3343 = vmatpush1.bf16.msra.mxu0 %v2210
  %3344 = vmatprep.subr.bf16.mxu0 %v2219
  %3345 = vmatpush1.bf16.msra.mxu0 %v2218
  %3346 = vmatprep.subr.bf16.mxu0 %v2227
  %3347 = vmatpush1.bf16.msra.mxu0 %v2226
  %3348 = vmatprep.subr.bf16.mxu0 %v2235
  %3349 = vmatpush1.bf16.msra.mxu0 %v2234
  %3350 = vmatprep.subr.bf16.mxu0 %v2243
  %3351 = vmatpush1.bf16.msra.mxu0 %v2242
  %3352 = vmatprep.subr.bf16.mxu0 %v2251
  %3353 = vmatpush1.bf16.msra.mxu0 %v2250
  %3354 = vmatprep.subr.bf16.mxu0 %v2259
  %3355 = vmatpush1.bf16.msra.mxu0 %v2258
  %3356 = vmatprep.mubr.bf16.mxu0 %v585
  %3357 = vmatmul.mubr.bf16.gmra.mrb[0].mxu0 %v584
  %v3358 = vpop.f32.mrb[0].mxu0
  %v3359 = vadd.f32 %v543, %v3358
  %v3360 = vpop.f32.mrb[0].mxu0
  %v3361 = vadd.f32 %v547, %v3360
  %v3362 = vpop.f32.mrb[0].mxu0
  %v3363 = vpop.f32.mrb[0].mxu0
  %3364 = vdwg.mxu0
  %3365 = vmatprep.subr.bf16.mxu0 %v2267
  %3366 = vmatpush1.bf16.msra.mxu0 %v2266
  %3367 = vmatprep.subr.bf16.mxu0 %v2275
  %3368 = vmatpush1.bf16.msra.mxu0 %v2274
  %3369 = vmatprep.subr.bf16.mxu0 %v2283
  %3370 = vmatpush1.bf16.msra.mxu0 %v2282
  %3371 = vmatprep.subr.bf16.mxu0 %v2291
  %3372 = vmatpush1.bf16.msra.mxu0 %v2290
  %3373 = vmatprep.subr.bf16.mxu0 %v2299
  %3374 = vmatpush1.bf16.msra.mxu0 %v2298
  %3375 = vmatprep.subr.bf16.mxu0 %v2307
  %3376 = vmatpush1.bf16.msra.mxu0 %v2306
  %3377 = vmatprep.subr.bf16.mxu0 %v2315
  %3378 = vmatpush1.bf16.msra.mxu0 %v2314
  %3379 = vmatprep.subr.bf16.mxu0 %v2323
  %3380 = vmatpush1.bf16.msra.mxu0 %v2322
  %3381 = vmatprep.subr.bf16.mxu0 %v2331
  %3382 = vmatpush1.bf16.msra.mxu0 %v2330
  %3383 = vmatprep.subr.bf16.mxu0 %v2339
  %3384 = vmatpush1.bf16.msra.mxu0 %v2338
  %3385 = vmatprep.subr.bf16.mxu0 %v2347
  %3386 = vmatpush1.bf16.msra.mxu0 %v2346
  %3387 = vmatprep.subr.bf16.mxu0 %v2355
  %3388 = vmatpush1.bf16.msra.mxu0 %v2354
  %3389 = vmatprep.subr.bf16.mxu0 %v2363
  %3390 = vmatpush1.bf16.msra.mxu0 %v2362
  %3391 = vmatprep.subr.bf16.mxu0 %v2371
  %3392 = vmatpush1.bf16.msra.mxu0 %v2370
  %3393 = vmatprep.subr.bf16.mxu0 %v2379
  %3394 = vmatpush1.bf16.msra.mxu0 %v2378
  %3395 = vmatprep.subr.bf16.mxu0 %v2387
  %3396 = vmatpush1.bf16.msra.mxu0 %v2386
  %3397 = vmatprep.mubr.bf16.mxu0 %v587
  %3398 = vmatmul.mubr.bf16.gmra.mrb[0].mxu0 %v586
  %v3399 = vpop.f32.mrb[0].mxu0
  %v3400 = vadd.f32 %v3359, %v3399
  %v3401 = vpop.f32.mrb[0].mxu0
  %v3402 = vadd.f32 %v3361, %v3401
  %v3403 = vpop.f32.mrb[0].mxu0
  %v3404 = vpop.f32.mrb[0].mxu0
  %3405 = vdwg.mxu0
  %3406 = vmatprep.subr.bf16.mxu0 %v2395
  %3407 = vmatpush1.bf16.msra.mxu0 %v2394
  %3408 = vmatprep.subr.bf16.mxu0 %v2403
  %3409 = vmatpush1.bf16.msra.mxu0 %v2402
  %3410 = vmatprep.subr.bf16.mxu0 %v2411
  %3411 = vmatpush1.bf16.msra.mxu0 %v2410
  %3412 = vmatprep.subr.bf16.mxu0 %v2419
  %3413 = vmatpush1.bf16.msra.mxu0 %v2418
  %3414 = vmatprep.subr.bf16.mxu0 %v2427
  %3415 = vmatpush1.bf16.msra.mxu0 %v2426
  %3416 = vmatprep.subr.bf16.mxu0 %v2435
  %3417 = vmatpush1.bf16.msra.mxu0 %v2434
  %3418 = vmatprep.subr.bf16.mxu0 %v2443
  %3419 = vmatpush1.bf16.msra.mxu0 %v2442
  %3420 = vmatprep.subr.bf16.mxu0 %v2451
  %3421 = vmatpush1.bf16.msra.mxu0 %v2450
  %3422 = vmatprep.subr.bf16.mxu0 %v2459
  %3423 = vmatpush1.bf16.msra.mxu0 %v2458
  %3424 = vmatprep.subr.bf16.mxu0 %v2467
  %3425 = vmatpush1.bf16.msra.mxu0 %v2466
  %3426 = vmatprep.subr.bf16.mxu0 %v2475
  %3427 = vmatpush1.bf16.msra.mxu0 %v2474
  %3428 = vmatprep.subr.bf16.mxu0 %v2483
  %3429 = vmatpush1.bf16.msra.mxu0 %v2482
  %3430 = vmatprep.subr.bf16.mxu0 %v2491
  %3431 = vmatpush1.bf16.msra.mxu0 %v2490
  %3432 = vmatprep.subr.bf16.mxu0 %v2499
  %3433 = vmatpush1.bf16.msra.mxu0 %v2498
  %3434 = vmatprep.subr.bf16.mxu0 %v2507
  %3435 = vmatpush1.bf16.msra.mxu0 %v2506
  %3436 = vmatprep.subr.bf16.mxu0 %v2515
  %3437 = vmatpush1.bf16.msra.mxu0 %v2514
  %3438 = vmatprep.mubr.bf16.mxu0 %v589
  %3439 = vmatmul.mubr.bf16.gmra.mrb[0].mxu0 %v588
  %v3440 = vpop.f32.mrb[0].mxu0
  %v3441 = vadd.f32 %v3400, %v3440
  %v3442 = vpop.f32.mrb[0].mxu0
  %v3443 = vadd.f32 %v3402, %v3442
  %v3444 = vpop.f32.mrb[0].mxu0
  %v3445 = vpop.f32.mrb[0].mxu0
  %3446 = vdwg.mxu0
  %3447 = vmatprep.subr.bf16.mxu0 %v2523
  %3448 = vmatpush1.bf16.msra.mxu0 %v2522
  %3449 = vmatprep.subr.bf16.mxu0 %v2531
  %3450 = vmatpush1.bf16.msra.mxu0 %v2530
  %3451 = vmatprep.subr.bf16.mxu0 %v2539
  %3452 = vmatpush1.bf16.msra.mxu0 %v2538
  %3453 = vmatprep.subr.bf16.mxu0 %v2547
  %3454 = vmatpush1.bf16.msra.mxu0 %v2546
  %3455 = vmatprep.subr.bf16.mxu0 %v2555
  %3456 = vmatpush1.bf16.msra.mxu0 %v2554
  %3457 = vmatprep.subr.bf16.mxu0 %v2563
  %3458 = vmatpush1.bf16.msra.mxu0 %v2562
  %3459 = vmatprep.subr.bf16.mxu0 %v2571
  %3460 = vmatpush1.bf16.msra.mxu0 %v2570
  %3461 = vmatprep.subr.bf16.mxu0 %v2579
  %3462 = vmatpush1.bf16.msra.mxu0 %v2578
  %3463 = vmatprep.subr.bf16.mxu0 %v2587
  %3464 = vmatpush1.bf16.msra.mxu0 %v2586
  %3465 = vmatprep.subr.bf16.mxu0 %v2595
  %3466 = vmatpush1.bf16.msra.mxu0 %v2594
  %3467 = vmatprep.subr.bf16.mxu0 %v2603
  %3468 = vmatpush1.bf16.msra.mxu0 %v2602
  %3469 = vmatprep.subr.bf16.mxu0 %v2611
  %3470 = vmatpush1.bf16.msra.mxu0 %v2610
  %3471 = vmatprep.subr.bf16.mxu0 %v2619
  %3472 = vmatpush1.bf16.msra.mxu0 %v2618
  %3473 = vmatprep.subr.bf16.mxu0 %v2627
  %3474 = vmatpush1.bf16.msra.mxu0 %v2626
  %3475 = vmatprep.subr.bf16.mxu0 %v2635
  %3476 = vmatpush1.bf16.msra.mxu0 %v2634
  %3477 = vmatprep.subr.bf16.mxu0 %v2643
  %3478 = vmatpush1.bf16.msra.mxu0 %v2642
  %3479 = vmatprep.mubr.bf16.mxu0 %v591
  %3480 = vmatmul.mubr.bf16.gmra.mrb[0].mxu0 %v590
  %v3481 = vpop.f32.mrb[0].mxu0
  %v3482 = vadd.f32 %v3441, %v3481
  %v3483 = vpop.f32.mrb[0].mxu0
  %v3484 = vadd.f32 %v3443, %v3483
  %v3485 = vpop.f32.mrb[0].mxu0
  %v3486 = vpop.f32.mrb[0].mxu0
  %3487 = vdwg.mxu0
  %3488 = vmatprep.subr.bf16.mxu0 %v2141
  %3489 = vmatpush1.bf16.msra.mxu0 %v2140
  %3490 = vmatprep.subr.bf16.mxu0 %v2149
  %3491 = vmatpush1.bf16.msra.mxu0 %v2148
  %3492 = vmatprep.subr.bf16.mxu0 %v2157
  %3493 = vmatpush1.bf16.msra.mxu0 %v2156
  %3494 = vmatprep.subr.bf16.mxu0 %v2165
  %3495 = vmatpush1.bf16.msra.mxu0 %v2164
  %3496 = vmatprep.subr.bf16.mxu0 %v2173
  %3497 = vmatpush1.bf16.msra.mxu0 %v2172
  %3498 = vmatprep.subr.bf16.mxu0 %v2181
  %3499 = vmatpush1.bf16.msra.mxu0 %v2180
  %3500 = vmatprep.subr.bf16.mxu0 %v2189
  %3501 = vmatpush1.bf16.msra.mxu0 %v2188
  %3502 = vmatprep.subr.bf16.mxu0 %v2197
  %3503 = vmatpush1.bf16.msra.mxu0 %v2196
  %3504 = vmatprep.subr.bf16.mxu0 %v2205
  %3505 = vmatpush1.bf16.msra.mxu0 %v2204
  %3506 = vmatprep.subr.bf16.mxu0 %v2213
  %3507 = vmatpush1.bf16.msra.mxu0 %v2212
  %3508 = vmatprep.subr.bf16.mxu0 %v2221
  %3509 = vmatpush1.bf16.msra.mxu0 %v2220
  %3510 = vmatprep.subr.bf16.mxu0 %v2229
  %3511 = vmatpush1.bf16.msra.mxu0 %v2228
  %3512 = vmatprep.subr.bf16.mxu0 %v2237
  %3513 = vmatpush1.bf16.msra.mxu0 %v2236
  %3514 = vmatprep.subr.bf16.mxu0 %v2245
  %3515 = vmatpush1.bf16.msra.mxu0 %v2244
  %3516 = vmatprep.subr.bf16.mxu0 %v2253
  %3517 = vmatpush1.bf16.msra.mxu0 %v2252
  %3518 = vmatprep.subr.bf16.mxu0 %v2261
  %3519 = vmatpush1.bf16.msra.mxu0 %v2260
  %3520 = vmatprep.mubr.bf16.mxu0 %v585
  %3521 = vmatmul.mubr.bf16.gmra.mrb[0].mxu0 %v584
  %v3522 = vpop.f32.mrb[0].mxu0
  %v3523 = vadd.f32 %v551, %v3522
  %v3524 = vpop.f32.mrb[0].mxu0
  %v3525 = vadd.f32 %v555, %v3524
  %v3526 = vpop.f32.mrb[0].mxu0
  %v3527 = vpop.f32.mrb[0].mxu0
  %3528 = vdwg.mxu0
  %3529 = vmatprep.subr.bf16.mxu0 %v2269
  %3530 = vmatpush1.bf16.msra.mxu0 %v2268
  %3531 = vmatprep.subr.bf16.mxu0 %v2277
  %3532 = vmatpush1.bf16.msra.mxu0 %v2276
  %3533 = vmatprep.subr.bf16.mxu0 %v2285
  %3534 = vmatpush1.bf16.msra.mxu0 %v2284
  %3535 = vmatprep.subr.bf16.mxu0 %v2293
  %3536 = vmatpush1.bf16.msra.mxu0 %v2292
  %3537 = vmatprep.subr.bf16.mxu0 %v2301
  %3538 = vmatpush1.bf16.msra.mxu0 %v2300
  %3539 = vmatprep.subr.bf16.mxu0 %v2309
  %3540 = vmatpush1.bf16.msra.mxu0 %v2308
  %3541 = vmatprep.subr.bf16.mxu0 %v2317
  %3542 = vmatpush1.bf16.msra.mxu0 %v2316
  %3543 = vmatprep.subr.bf16.mxu0 %v2325
  %3544 = vmatpush1.bf16.msra.mxu0 %v2324
  %3545 = vmatprep.subr.bf16.mxu0 %v2333
  %3546 = vmatpush1.bf16.msra.mxu0 %v2332
  %3547 = vmatprep.subr.bf16.mxu0 %v2341
  %3548 = vmatpush1.bf16.msra.mxu0 %v2340
  %3549 = vmatprep.subr.bf16.mxu0 %v2349
  %3550 = vmatpush1.bf16.msra.mxu0 %v2348
  %3551 = vmatprep.subr.bf16.mxu0 %v2357
  %3552 = vmatpush1.bf16.msra.mxu0 %v2356
  %3553 = vmatprep.subr.bf16.mxu0 %v2365
  %3554 = vmatpush1.bf16.msra.mxu0 %v2364
  %3555 = vmatprep.subr.bf16.mxu0 %v2373
  %3556 = vmatpush1.bf16.msra.mxu0 %v2372
  %3557 = vmatprep.subr.bf16.mxu0 %v2381
  %3558 = vmatpush1.bf16.msra.mxu0 %v2380
  %3559 = vmatprep.subr.bf16.mxu0 %v2389
  %3560 = vmatpush1.bf16.msra.mxu0 %v2388
  %3561 = vmatprep.mubr.bf16.mxu0 %v587
  %3562 = vmatmul.mubr.bf16.gmra.mrb[0].mxu0 %v586
  %v3563 = vpop.f32.mrb[0].mxu0
  %v3564 = vadd.f32 %v3523, %v3563
  %v3565 = vpop.f32.mrb[0].mxu0
  %v3566 = vadd.f32 %v3525, %v3565
  %v3567 = vpop.f32.mrb[0].mxu0
  %v3568 = vpop.f32.mrb[0].mxu0
  %3569 = vdwg.mxu0
  %3570 = vmatprep.subr.bf16.mxu0 %v2397
  %3571 = vmatpush1.bf16.msra.mxu0 %v2396
  %3572 = vmatprep.subr.bf16.mxu0 %v2405
  %3573 = vmatpush1.bf16.msra.mxu0 %v2404
  %3574 = vmatprep.subr.bf16.mxu0 %v2413
  %3575 = vmatpush1.bf16.msra.mxu0 %v2412
  %3576 = vmatprep.subr.bf16.mxu0 %v2421
  %3577 = vmatpush1.bf16.msra.mxu0 %v2420
  %3578 = vmatprep.subr.bf16.mxu0 %v2429
  %3579 = vmatpush1.bf16.msra.mxu0 %v2428
  %3580 = vmatprep.subr.bf16.mxu0 %v2437
  %3581 = vmatpush1.bf16.msra.mxu0 %v2436
  %3582 = vmatprep.subr.bf16.mxu0 %v2445
  %3583 = vmatpush1.bf16.msra.mxu0 %v2444
  %3584 = vmatprep.subr.bf16.mxu0 %v2453
  %3585 = vmatpush1.bf16.msra.mxu0 %v2452
  %3586 = vmatprep.subr.bf16.mxu0 %v2461
  %3587 = vmatpush1.bf16.msra.mxu0 %v2460
  %3588 = vmatprep.subr.bf16.mxu0 %v2469
  %3589 = vmatpush1.bf16.msra.mxu0 %v2468
  %3590 = vmatprep.subr.bf16.mxu0 %v2477
  %3591 = vmatpush1.bf16.msra.mxu0 %v2476
  %3592 = vmatprep.subr.bf16.mxu0 %v2485
  %3593 = vmatpush1.bf16.msra.mxu0 %v2484
  %3594 = vmatprep.subr.bf16.mxu0 %v2493
  %3595 = vmatpush1.bf16.msra.mxu0 %v2492
  %3596 = vmatprep.subr.bf16.mxu0 %v2501
  %3597 = vmatpush1.bf16.msra.mxu0 %v2500
  %3598 = vmatprep.subr.bf16.mxu0 %v2509
  %3599 = vmatpush1.bf16.msra.mxu0 %v2508
  %3600 = vmatprep.subr.bf16.mxu0 %v2517
  %3601 = vmatpush1.bf16.msra.mxu0 %v2516
  %3602 = vmatprep.mubr.bf16.mxu0 %v589
  %3603 = vmatmul.mubr.bf16.gmra.mrb[0].mxu0 %v588
  %v3604 = vpop.f32.mrb[0].mxu0
  %v3605 = vadd.f32 %v3564, %v3604
  %v3606 = vpop.f32.mrb[0].mxu0
  %v3607 = vadd.f32 %v3566, %v3606
  %v3608 = vpop.f32.mrb[0].mxu0
  %v3609 = vpop.f32.mrb[0].mxu0
  %3610 = vdwg.mxu0
  %3611 = vmatprep.subr.bf16.mxu0 %v2525
  %3612 = vmatpush1.bf16.msra.mxu0 %v2524
  %3613 = vmatprep.subr.bf16.mxu0 %v2533
  %3614 = vmatpush1.bf16.msra.mxu0 %v2532
  %3615 = vmatprep.subr.bf16.mxu0 %v2541
  %3616 = vmatpush1.bf16.msra.mxu0 %v2540
  %3617 = vmatprep.subr.bf16.mxu0 %v2549
  %3618 = vmatpush1.bf16.msra.mxu0 %v2548
  %3619 = vmatprep.subr.bf16.mxu0 %v2557
  %3620 = vmatpush1.bf16.msra.mxu0 %v2556
  %3621 = vmatprep.subr.bf16.mxu0 %v2565
  %3622 = vmatpush1.bf16.msra.mxu0 %v2564
  %3623 = vmatprep.subr.bf16.mxu0 %v2573
  %3624 = vmatpush1.bf16.msra.mxu0 %v2572
  %3625 = vmatprep.subr.bf16.mxu0 %v2581
  %3626 = vmatpush1.bf16.msra.mxu0 %v2580
  %3627 = vmatprep.subr.bf16.mxu0 %v2589
  %3628 = vmatpush1.bf16.msra.mxu0 %v2588
  %3629 = vmatprep.subr.bf16.mxu0 %v2597
  %3630 = vmatpush1.bf16.msra.mxu0 %v2596
  %3631 = vmatprep.subr.bf16.mxu0 %v2605
  %3632 = vmatpush1.bf16.msra.mxu0 %v2604
  %3633 = vmatprep.subr.bf16.mxu0 %v2613
  %3634 = vmatpush1.bf16.msra.mxu0 %v2612
  %3635 = vmatprep.subr.bf16.mxu0 %v2621
  %3636 = vmatpush1.bf16.msra.mxu0 %v2620
  %3637 = vmatprep.subr.bf16.mxu0 %v2629
  %3638 = vmatpush1.bf16.msra.mxu0 %v2628
  %3639 = vmatprep.subr.bf16.mxu0 %v2637
  %3640 = vmatpush1.bf16.msra.mxu0 %v2636
  %3641 = vmatprep.subr.bf16.mxu0 %v2645
  %3642 = vmatpush1.bf16.msra.mxu0 %v2644
  %3643 = vmatprep.mubr.bf16.mxu0 %v591
  %3644 = vmatmul.mubr.bf16.gmra.mrb[0].mxu0 %v590
  %v3645 = vpop.f32.mrb[0].mxu0
  %v3646 = vadd.f32 %v3605, %v3645
  %v3647 = vpop.f32.mrb[0].mxu0
  %v3648 = vadd.f32 %v3607, %v3647
  %v3649 = vpop.f32.mrb[0].mxu0
  %v3650 = vpop.f32.mrb[0].mxu0
  %3651 = vdwg.mxu0
  %3652 = vmatprep.subr.bf16.mxu0 %v2143
  %3653 = vmatpush1.bf16.msra.mxu0 %v2142
  %3654 = vmatprep.subr.bf16.mxu0 %v2151
  %3655 = vmatpush1.bf16.msra.mxu0 %v2150
  %3656 = vmatprep.subr.bf16.mxu0 %v2159
  %3657 = vmatpush1.bf16.msra.mxu0 %v2158
  %3658 = vmatprep.subr.bf16.mxu0 %v2167
  %3659 = vmatpush1.bf16.msra.mxu0 %v2166
  %3660 = vmatprep.subr.bf16.mxu0 %v2175
  %3661 = vmatpush1.bf16.msra.mxu0 %v2174
  %3662 = vmatprep.subr.bf16.mxu0 %v2183
  %3663 = vmatpush1.bf16.msra.mxu0 %v2182
  %3664 = vmatprep.subr.bf16.mxu0 %v2191
  %3665 = vmatpush1.bf16.msra.mxu0 %v2190
  %3666 = vmatprep.subr.bf16.mxu0 %v2199
  %3667 = vmatpush1.bf16.msra.mxu0 %v2198
  %3668 = vmatprep.subr.bf16.mxu0 %v2207
  %3669 = vmatpush1.bf16.msra.mxu0 %v2206
  %3670 = vmatprep.subr.bf16.mxu0 %v2215
  %3671 = vmatpush1.bf16.msra.mxu0 %v2214
  %3672 = vmatprep.subr.bf16.mxu0 %v2223
  %3673 = vmatpush1.bf16.msra.mxu0 %v2222
  %3674 = vmatprep.subr.bf16.mxu0 %v2231
  %3675 = vmatpush1.bf16.msra.mxu0 %v2230
  %3676 = vmatprep.subr.bf16.mxu0 %v2239
  %3677 = vmatpush1.bf16.msra.mxu0 %v2238
  %3678 = vmatprep.subr.bf16.mxu0 %v2247
  %3679 = vmatpush1.bf16.msra.mxu0 %v2246
  %3680 = vmatprep.subr.bf16.mxu0 %v2255
  %3681 = vmatpush1.bf16.msra.mxu0 %v2254
  %3682 = vmatprep.subr.bf16.mxu0 %v2263
  %3683 = vmatpush1.bf16.msra.mxu0 %v2262
  %3684 = vmatprep.mubr.bf16.mxu0 %v585
  %3685 = vmatmul.mubr.bf16.gmra.mrb[0].mxu0 %v584
  %v3686 = vpop.f32.mrb[0].mxu0
  %v3687 = vadd.f32 %v559, %v3686
  %v3688 = vpop.f32.mrb[0].mxu0
  %v3689 = vadd.f32 %v563, %v3688
  %v3690 = vpop.f32.mrb[0].mxu0
  %v3691 = vpop.f32.mrb[0].mxu0
  %3692 = vdwg.mxu0
  %3693 = vmatprep.subr.bf16.mxu0 %v2271
  %3694 = vmatpush1.bf16.msra.mxu0 %v2270
  %3695 = vmatprep.subr.bf16.mxu0 %v2279
  %3696 = vmatpush1.bf16.msra.mxu0 %v2278
  %3697 = vmatprep.subr.bf16.mxu0 %v2287
  %3698 = vmatpush1.bf16.msra.mxu0 %v2286
  %3699 = vmatprep.subr.bf16.mxu0 %v2295
  %3700 = vmatpush1.bf16.msra.mxu0 %v2294
  %3701 = vmatprep.subr.bf16.mxu0 %v2303
  %3702 = vmatpush1.bf16.msra.mxu0 %v2302
  %3703 = vmatprep.subr.bf16.mxu0 %v2311
  %3704 = vmatpush1.bf16.msra.mxu0 %v2310
  %3705 = vmatprep.subr.bf16.mxu0 %v2319
  %3706 = vmatpush1.bf16.msra.mxu0 %v2318
  %3707 = vmatprep.subr.bf16.mxu0 %v2327
  %3708 = vmatpush1.bf16.msra.mxu0 %v2326
  %3709 = vmatprep.subr.bf16.mxu0 %v2335
  %3710 = vmatpush1.bf16.msra.mxu0 %v2334
  %3711 = vmatprep.subr.bf16.mxu0 %v2343
  %3712 = vmatpush1.bf16.msra.mxu0 %v2342
  %3713 = vmatprep.subr.bf16.mxu0 %v2351
  %3714 = vmatpush1.bf16.msra.mxu0 %v2350
  %3715 = vmatprep.subr.bf16.mxu0 %v2359
  %3716 = vmatpush1.bf16.msra.mxu0 %v2358
  %3717 = vmatprep.subr.bf16.mxu0 %v2367
  %3718 = vmatpush1.bf16.msra.mxu0 %v2366
  %3719 = vmatprep.subr.bf16.mxu0 %v2375
  %3720 = vmatpush1.bf16.msra.mxu0 %v2374
  %3721 = vmatprep.subr.bf16.mxu0 %v2383
  %3722 = vmatpush1.bf16.msra.mxu0 %v2382
  %3723 = vmatprep.subr.bf16.mxu0 %v2391
  %3724 = vmatpush1.bf16.msra.mxu0 %v2390
  %3725 = vmatprep.mubr.bf16.mxu0 %v587
  %3726 = vmatmul.mubr.bf16.gmra.mrb[0].mxu0 %v586
  %v3727 = vpop.f32.mrb[0].mxu0
  %v3728 = vadd.f32 %v3687, %v3727
  %v3729 = vpop.f32.mrb[0].mxu0
  %v3730 = vadd.f32 %v3689, %v3729
  %v3731 = vpop.f32.mrb[0].mxu0
  %v3732 = vpop.f32.mrb[0].mxu0
  %3733 = vdwg.mxu0
  %3734 = vmatprep.subr.bf16.mxu0 %v2399
  %3735 = vmatpush1.bf16.msra.mxu0 %v2398
  %3736 = vmatprep.subr.bf16.mxu0 %v2407
  %3737 = vmatpush1.bf16.msra.mxu0 %v2406
  %3738 = vmatprep.subr.bf16.mxu0 %v2415
  %3739 = vmatpush1.bf16.msra.mxu0 %v2414
  %3740 = vmatprep.subr.bf16.mxu0 %v2423
  %3741 = vmatpush1.bf16.msra.mxu0 %v2422
  %3742 = vmatprep.subr.bf16.mxu0 %v2431
  %3743 = vmatpush1.bf16.msra.mxu0 %v2430
  %3744 = vmatprep.subr.bf16.mxu0 %v2439
  %3745 = vmatpush1.bf16.msra.mxu0 %v2438
  %3746 = vmatprep.subr.bf16.mxu0 %v2447
  %3747 = vmatpush1.bf16.msra.mxu0 %v2446
  %3748 = vmatprep.subr.bf16.mxu0 %v2455
  %3749 = vmatpush1.bf16.msra.mxu0 %v2454
  %3750 = vmatprep.subr.bf16.mxu0 %v2463
  %3751 = vmatpush1.bf16.msra.mxu0 %v2462
  %3752 = vmatprep.subr.bf16.mxu0 %v2471
  %3753 = vmatpush1.bf16.msra.mxu0 %v2470
  %3754 = vmatprep.subr.bf16.mxu0 %v2479
  %3755 = vmatpush1.bf16.msra.mxu0 %v2478
  %3756 = vmatprep.subr.bf16.mxu0 %v2487
  %3757 = vmatpush1.bf16.msra.mxu0 %v2486
  %3758 = vmatprep.subr.bf16.mxu0 %v2495
  %3759 = vmatpush1.bf16.msra.mxu0 %v2494
  %3760 = vmatprep.subr.bf16.mxu0 %v2503
  %3761 = vmatpush1.bf16.msra.mxu0 %v2502
  %3762 = vmatprep.subr.bf16.mxu0 %v2511
  %3763 = vmatpush1.bf16.msra.mxu0 %v2510
  %3764 = vmatprep.subr.bf16.mxu0 %v2519
  %3765 = vmatpush1.bf16.msra.mxu0 %v2518
  %3766 = vmatprep.mubr.bf16.mxu0 %v589
  %3767 = vmatmul.mubr.bf16.gmra.mrb[0].mxu0 %v588
  %v3768 = vpop.f32.mrb[0].mxu0
  %v3769 = vadd.f32 %v3728, %v3768
  %v3770 = vpop.f32.mrb[0].mxu0
  %v3771 = vadd.f32 %v3730, %v3770
  %v3772 = vpop.f32.mrb[0].mxu0
  %v3773 = vpop.f32.mrb[0].mxu0
  %3774 = vdwg.mxu0
  %3775 = vmatprep.subr.bf16.mxu0 %v2527
  %3776 = vmatpush1.bf16.msra.mxu0 %v2526
  %3777 = vmatprep.subr.bf16.mxu0 %v2535
  %3778 = vmatpush1.bf16.msra.mxu0 %v2534
  %3779 = vmatprep.subr.bf16.mxu0 %v2543
  %3780 = vmatpush1.bf16.msra.mxu0 %v2542
  %3781 = vmatprep.subr.bf16.mxu0 %v2551
  %3782 = vmatpush1.bf16.msra.mxu0 %v2550
  %3783 = vmatprep.subr.bf16.mxu0 %v2559
  %3784 = vmatpush1.bf16.msra.mxu0 %v2558
  %3785 = vmatprep.subr.bf16.mxu0 %v2567
  %3786 = vmatpush1.bf16.msra.mxu0 %v2566
  %3787 = vmatprep.subr.bf16.mxu0 %v2575
  %3788 = vmatpush1.bf16.msra.mxu0 %v2574
  %3789 = vmatprep.subr.bf16.mxu0 %v2583
  %3790 = vmatpush1.bf16.msra.mxu0 %v2582
  %3791 = vmatprep.subr.bf16.mxu0 %v2591
  %3792 = vmatpush1.bf16.msra.mxu0 %v2590
  %3793 = vmatprep.subr.bf16.mxu0 %v2599
  %3794 = vmatpush1.bf16.msra.mxu0 %v2598
  %3795 = vmatprep.subr.bf16.mxu0 %v2607
  %3796 = vmatpush1.bf16.msra.mxu0 %v2606
  %3797 = vmatprep.subr.bf16.mxu0 %v2615
  %3798 = vmatpush1.bf16.msra.mxu0 %v2614
  %3799 = vmatprep.subr.bf16.mxu0 %v2623
  %3800 = vmatpush1.bf16.msra.mxu0 %v2622
  %3801 = vmatprep.subr.bf16.mxu0 %v2631
  %3802 = vmatpush1.bf16.msra.mxu0 %v2630
  %3803 = vmatprep.subr.bf16.mxu0 %v2639
  %3804 = vmatpush1.bf16.msra.mxu0 %v2638
  %3805 = vmatprep.subr.bf16.mxu0 %v2647
  %3806 = vmatpush1.bf16.msra.mxu0 %v2646
  %3807 = vmatprep.mubr.bf16.mxu0 %v591
  %3808 = vmatmul.mubr.bf16.gmra.mrb[0].mxu0 %v590
  %v3809 = vpop.f32.mrb[0].mxu0
  %v3810 = vadd.f32 %v3769, %v3809
  %v3811 = vpop.f32.mrb[0].mxu0
  %v3812 = vadd.f32 %v3771, %v3811
  %v3813 = vpop.f32.mrb[0].mxu0
  %v3814 = vpop.f32.mrb[0].mxu0
  %3815 = vdwg.mxu0
  %3816 = vst [vmem:[%s3] sm:$0xff] %v3318
  %3817 = vst [vmem:[%s3 + $0x8] sm:$0xff] %v3320
  %3818 = vst [vmem:[%s3 + $0x10] sm:$0xff] %v3482
  %3819 = vst [vmem:[%s3 + $0x18] sm:$0xff] %v3484
  %3820 = vst [vmem:[%s3 + $0x20] sm:$0xff] %v3646
  %3821 = vst [vmem:[%s3 + $0x28] sm:$0xff] %v3648
  %3822 = vst [vmem:[%s3 + $0x30] sm:$0xff] %v3810
  %3823 = vst [vmem:[%s3 + $0x38] sm:$0xff] %v3812
  // Predicated region
  $region14: #{bart_policy_heads.1} parent=0 // pred_check
    _
  $region15: #{bart_policy_heads.1} parent=0 // pred_check_branch
    %3825 = sbr.rel (0) target = $region17
  $region16: #{bart_policy_heads.1} parent=0 // pred_region
    _
  $region17: #{bart_policy_heads.1} parent=0 // pred_fallthru
    _
  // Predicated region
  $region18: #{bart_policy_heads.1} parent=0 // pred_check
    _
  $region19: #{bart_policy_heads.1} parent=0 // pred_check_branch
    %3827 = sbr.rel (0) target = $region21
  $region20: #{bart_policy_heads.1} parent=0 // pred_region
    _
  $region21: #{bart_policy_heads.1} parent=0 // pred_fallthru
    _

</llo_original>
